<compile_context>
chip_gen: v7x
topology: tpu7x:2x2x1
jax: 0.10.0
libtpu: 0.0.40
codegen_flags: <defaults>
</compile_context>

<pallas_src>
import math

import jax
import jax.numpy as jnp
from jax.experimental import pallas as pl
from jax.experimental.pallas import tpu as pltpu

N = 64           # num_nodes
F_IN = 32        # input node-feature dim
H = 32           # num_hidden_channels
NUM_LAYERS = 4   # num_layers (one JK 'cat' block)
ALPHA = 0.1
THETA = 0.5
BN_EPS = 1e-5

# Packed-parameter row offsets (each section starts on an 8-row boundary so the static
# ref slices inside the kernel stay aligned to (8, 128) VMEM tiles).
P_W0 = 0                              # rows [  0,  32): GCNConv weight  (F_IN, H)
P_B0 = 32                             # row    32      : GCNConv bias    (1, H)
P_GAMMA = 40                          # rows [ 40,  44): BN gamma        (NUM_LAYERS, H)
P_BETA = 48                           # rows [ 48,  52): BN beta         (NUM_LAYERS, H)
P_BJK = 56                            # row    56      : JK Linear bias  (1, H)
P_WCONV = 64                          # rows [ 64, 192): folded GCN2Conv weights (4H, H)
P_WJK = P_WCONV + NUM_LAYERS * H      # rows [192, 320): JK Linear weight (4H, H)
P_ROWS = P_WJK + NUM_LAYERS * H       # 320


def fold_gcn2_weights(wconv):
    """Exact algebraic fold: (1-b)*h + b*(h @ W)  ==  h @ ((1-b)*I + b*W)."""
    eye = jnp.eye(H, dtype=jnp.float32)
    folded = []
    for i in range(NUM_LAYERS):
        beta_i = math.log(THETA / (i + 1) + 1.0)
        folded.append((1.0 - beta_i) * eye + beta_i * wconv[i])
    return jnp.stack(folded)                       # (NUM_LAYERS, H, H)


def pack_params(w0, b0, wconv_folded, gamma, beta, wjk, bjk):
    """Pack all parameters into one contiguous [P_ROWS, H] f32 buffer (single DMA)."""
    p = jnp.zeros((P_ROWS, H), dtype=jnp.float32)
    p = p.at[P_W0:P_W0 + F_IN, :].set(w0)
    p = p.at[P_B0, :].set(b0[0])
    p = p.at[P_GAMMA:P_GAMMA + NUM_LAYERS, :].set(gamma)
    p = p.at[P_BETA:P_BETA + NUM_LAYERS, :].set(beta)
    p = p.at[P_BJK, :].set(bjk[0])
    p = p.at[P_WCONV:P_WCONV + NUM_LAYERS * H, :].set(
        wconv_folded.reshape(NUM_LAYERS * H, H))
    p = p.at[P_WJK:P_WJK + NUM_LAYERS * H, :].set(wjk)
    return p


def gcnii_jk_kernel(x_ref, adj_ref, params_ref, out_ref):
    # adj_ref[0] = A_hat = D^-1/2 (A+I) D^-1/2   (GCNConv propagation)
    # adj_ref[1] = (1 - ALPHA) * A               (GCN2Conv propagation, alpha pre-folded)

    # --- lins[0]: GCNConv  z = A_hat @ (x @ W0) + b0 ---
    xw = jnp.dot(x_ref[...], params_ref[P_W0:P_W0 + F_IN, :],
                 preferred_element_type=jnp.float32)
    z = (jnp.dot(adj_ref[0], xw, preferred_element_type=jnp.float32)
         + params_ref[P_B0:P_B0 + 1, :])
    x0a = ALPHA * z                    # alpha * x_0, hoisted out of the layer loop

    inv_n = 1.0 / N
    zs = []
    for i in range(NUM_LAYERS):
        # GCN2Conv (alpha/beta already folded into adj_ref[1] and the packed weights):
        #   h  = ((1-alpha)*A) @ z + alpha*x_0
        #   zi = h @ ((1-beta_i)*I + beta_i*Wi)
        h = jnp.dot(adj_ref[1], z, preferred_element_type=jnp.float32) + x0a
        wi = params_ref[P_WCONV + i * H:P_WCONV + (i + 1) * H, :]
        zi = jnp.dot(h, wi, preferred_element_type=jnp.float32)
        zs.append(zi)
        if i < NUM_LAYERS - 1:
            # BatchNorm1d (training-mode biased batch stats) + ReLU, single reduction pass:
            #   zn = gamma*(zi-mean)*rsqrt(var+eps)+beta = zi*s + (beta - mean*s),
            #   s  = gamma*rsqrt(var+eps),   var = E[zi^2] - mean^2
            mean = jnp.sum(zi, axis=0, keepdims=True) * inv_n
            ex2 = jnp.sum(zi * zi, axis=0, keepdims=True) * inv_n
            var = ex2 - mean * mean
            g = params_ref[P_GAMMA + i:P_GAMMA + i + 1, :]
            b = params_ref[P_BETA + i:P_BETA + i + 1, :]
            s = g * jax.lax.rsqrt(var + BN_EPS)
            z = jnp.maximum(zi * s + (b - mean * s), 0.0)    # activation='relu'
        # else: the reference module's batchnorms[-1](zi) result is discarded (overwritten
        # by the JK aggregation), so it is skipped here.

    # --- JumpingKnowledge('cat') + lins[-1]: one lane-dense K=4H matmul ---
    zcat = jnp.concatenate(zs, axis=-1)                       # (N, 4H) = (64, 128)
    out = (jnp.dot(zcat, params_ref[P_WJK:P_WJK + NUM_LAYERS * H, :],
                   preferred_element_type=jnp.float32)
           + params_ref[P_BJK:P_BJK + 1, :])
    out_ref[...] = out.astype(out_ref.dtype)


def gcnii_jk_forward(x, adj_hat, adj, w0, b0, wconv, gamma, beta, wjk, bjk):
    # Host-side prep: fold scalars into matmul operands, coalesce inputs into 3 buffers.
    adj_pack = jnp.stack([adj_hat, (1.0 - ALPHA) * adj])      # (2, N, N), one DMA
    params = pack_params(w0, b0, fold_gcn2_weights(wconv), gamma, beta, wjk, bjk)
    return pl.pallas_call(
        gcnii_jk_kernel,
        out_shape=jax.ShapeDtypeStruct((N, H), jnp.float32),
        # Single invocation (no grid): everything fits in VMEM at this size.
        # TODO(synk): for large N, row-tile the dense adjacencies with a BlockSpec grid
        # ("parallel" row axis) instead of keeping them fully resident (v7x: 64 MiB VMEM).
        in_specs=[pl.BlockSpec(memory_space=pltpu.MemorySpace.VMEM)] * 3,
        out_specs=pl.BlockSpec(memory_space=pltpu.MemorySpace.VMEM),
    )(x, adj_pack, params)


def reference_forward(x, adj_hat, adj, w0, b0, wconv, gamma, beta, wjk, bjk):
    """Pure-JAX mirror of the PyTorch forward.

    Uses the same exact algebraic rewrites as the kernel so that every matmul sees
    bit-identical operands (TPU matmuls may round f32 operands internally; identical
    operands keep the comparison tight):
        (1-alpha)*(A@z) + alpha*x0     == ((1-alpha)*A) @ z + alpha*x0
        (1-beta_i)*h + beta_i*(h @ Wi) == h @ ((1-beta_i)*I + beta_i*Wi)
    BatchNorm is evaluated in the standard two-pass form to cross-check the kernel's
    single-pass reformulation.
    """
    a_s = (1.0 - ALPHA) * adj
    wconv_f = fold_gcn2_weights(wconv)
    z = adj_hat @ (x @ w0) + b0
    x0 = z
    zs = []
    for i in range(NUM_LAYERS):
        h = a_s @ z + ALPHA * x0
        zi = h @ wconv_f[i]
        zs.append(zi)
        if i < NUM_LAYERS - 1:
            mean = jnp.mean(zi, axis=0, keepdims=True)
            var = jnp.mean((zi - mean) ** 2, axis=0, keepdims=True)
            zn = (zi - mean) / jnp.sqrt(var + BN_EPS)
            z = jnp.maximum(gamma[i][None, :] * zn + beta[i][None, :], 0.0)
    zcat = jnp.concatenate(zs, axis=1)          # JumpingKnowledge('cat') + lins[-1]
    return zcat @ wjk + bjk


if __name__ == "__main__":
    key = jax.random.PRNGKey(0)
    k_x, k_e, k_w0, k_wc, k_g, k_b, k_wjk, k_bjk = jax.random.split(key, 8)

    # Node features
    x = jax.random.normal(k_x, (N, F_IN), dtype=jnp.float32)

    # Deterministic symmetric random graph (no self loops), densified adjacency.
    probs = jax.random.uniform(k_e, (N, N))
    upper = jnp.triu(probs < 0.15, k=1).astype(jnp.float32)
    adj = upper + upper.T                                   # plain A (GCN2Conv, normalize=False)
    adj_tilde = adj + jnp.eye(N, dtype=jnp.float32)         # A + I   (GCNConv gcn_norm)
    deg = jnp.sum(adj_tilde, axis=1)
    dinv = 1.0 / jnp.sqrt(deg)
    adj_hat = dinv[:, None] * adj_tilde * dinv[None, :]     # D^-1/2 (A+I) D^-1/2

    # Parameters (deterministic synthetic init; shapes follow the module's __init__).
    w0 = jax.random.normal(k_w0, (F_IN, H), dtype=jnp.float32) / math.sqrt(F_IN)
    b0 = jnp.zeros((1, H), dtype=jnp.float32)                        # GCNConv bias (zero init)
    wconv = jax.random.normal(k_wc, (NUM_LAYERS, H, H), dtype=jnp.float32) / math.sqrt(H)
    gamma = 1.0 + 0.1 * jax.random.normal(k_g, (NUM_LAYERS, H), dtype=jnp.float32)
    beta = 0.1 * jax.random.normal(k_b, (NUM_LAYERS, H), dtype=jnp.float32)
    wjk = jax.random.normal(k_wjk, (NUM_LAYERS * H, H), dtype=jnp.float32) / math.sqrt(NUM_LAYERS * H)
    bjk = 0.01 * jax.random.normal(k_bjk, (1, H), dtype=jnp.float32)

    out = gcnii_jk_forward(x, adj_hat, adj, w0, b0, wconv, gamma, beta, wjk, bjk)
    out = jax.block_until_ready(out)

    ref = reference_forward(x, adj_hat, adj, w0, b0, wconv, gamma, beta, wjk, bjk)
    # Tolerance covers reordered f32 accumulations (fused JK matmul, single-pass BN).
    if not jnp.allclose(out, ref, rtol=5e-4, atol=5e-4):
        raise AssertionError("Pallas kernel output does not match JAX reference")

    print("KERNEL_OK")
</pallas_src>

<mosaic_0001>
module attributes {stable_mosaic.version = 11 : i64} {
  func.func @gcnii_jk_kernel(%arg0: memref<64x32xf32, #tpu.memory_space<vmem>>, %arg1: memref<2x64x64xf32, #tpu.memory_space<vmem>>, %arg2: memref<320x32xf32, #tpu.memory_space<vmem>>, %arg3: memref<64x32xf32, #tpu.memory_space<vmem>>) attributes {dimension_semantics = [], scalar_prefetch = 0 : i64, scratch_operands = 0 : i64, tpu.core_type = #tpu.core_type<tc>} {
    %c0 = arith.constant 0 : index
    %c0_0 = arith.constant 0 : index
    %0 = vector.load %arg0[%c0, %c0_0] : memref<64x32xf32, #tpu.memory_space<vmem>>, vector<64x32xf32>
    %c0_1 = arith.constant 0 : index
    %c0_2 = arith.constant 0 : index
    %1 = vector.load %arg2[%c0_1, %c0_2] : memref<320x32xf32, #tpu.memory_space<vmem>>, vector<32x32xf32>
    %cst = arith.constant dense<0.000000e+00> : vector<64x32xf32>
    %2 = tpu.matmul %0, %1, %cst {dimension_numbers = #tpu.dot_dimension_numbers<[1], [0], [0], [1], [0, 0, 1, 1], [], []>} : vector<64x32xf32>, vector<32x32xf32>, vector<64x32xf32> -> vector<64x32xf32>
    %c0_3 = arith.constant 0 : index
    %c0_4 = arith.constant 0 : index
    %c0_5 = arith.constant 0 : index
    %3 = vector.load %arg1[%c0_3, %c0_4, %c0_5] : memref<2x64x64xf32, #tpu.memory_space<vmem>>, vector<1x64x64xf32>
    %4 = vector.shape_cast %3 : vector<1x64x64xf32> to vector<64x64xf32>
    %cst_6 = arith.constant dense<0.000000e+00> : vector<64x32xf32>
    %5 = tpu.matmul %4, %2, %cst_6 {dimension_numbers = #tpu.dot_dimension_numbers<[1], [0], [0], [1], [0, 0, 1, 1], [], []>} : vector<64x64xf32>, vector<64x32xf32>, vector<64x32xf32> -> vector<64x32xf32>
    %c32 = arith.constant 32 : index
    %c0_7 = arith.constant 0 : index
    %6 = vector.load %arg2[%c32, %c0_7] : memref<320x32xf32, #tpu.memory_space<vmem>>, vector<1x32xf32>
    %7 = vector.broadcast %6 : vector<1x32xf32> to vector<64x32xf32>
    %8 = arith.addf %5, %7 : vector<64x32xf32>
    %cst_8 = arith.constant 1.000000e-01 : f32
    %9 = vector.broadcast %cst_8 : f32 to vector<64x32xf32>
    %10 = arith.mulf %9, %8 : vector<64x32xf32>
    %c1 = arith.constant 1 : index
    %c0_9 = arith.constant 0 : index
    %c0_10 = arith.constant 0 : index
    %11 = vector.load %arg1[%c1, %c0_9, %c0_10] : memref<2x64x64xf32, #tpu.memory_space<vmem>>, vector<1x64x64xf32>
    %12 = vector.shape_cast %11 : vector<1x64x64xf32> to vector<64x64xf32>
    %cst_11 = arith.constant dense<0.000000e+00> : vector<64x32xf32>
    %13 = tpu.matmul %12, %8, %cst_11 {dimension_numbers = #tpu.dot_dimension_numbers<[1], [0], [0], [1], [0, 0, 1, 1], [], []>} : vector<64x64xf32>, vector<64x32xf32>, vector<64x32xf32> -> vector<64x32xf32>
    %14 = arith.addf %13, %10 : vector<64x32xf32>
    %c64 = arith.constant 64 : index
    %c0_12 = arith.constant 0 : index
    %15 = vector.load %arg2[%c64, %c0_12] : memref<320x32xf32, #tpu.memory_space<vmem>>, vector<32x32xf32>
    %cst_13 = arith.constant dense<0.000000e+00> : vector<64x32xf32>
    %16 = tpu.matmul %14, %15, %cst_13 {dimension_numbers = #tpu.dot_dimension_numbers<[1], [0], [0], [1], [0, 0, 1, 1], [], []>} : vector<64x32xf32>, vector<32x32xf32>, vector<64x32xf32> -> vector<64x32xf32>
    %cst_14 = arith.constant dense<0.000000e+00> : vector<32xf32>
    %17 = vector.multi_reduction <add>, %16, %cst_14 [0] : vector<64x32xf32> to vector<32xf32>
    %18 = vector.shape_cast %17 : vector<32xf32> to vector<1x32xf32>
    %cst_15 = arith.constant 1.562500e-02 : f32
    %19 = vector.broadcast %cst_15 : f32 to vector<1x32xf32>
    %20 = arith.mulf %18, %19 : vector<1x32xf32>
    %21 = arith.mulf %16, %16 : vector<64x32xf32>
    %cst_16 = arith.constant dense<0.000000e+00> : vector<32xf32>
    %22 = vector.multi_reduction <add>, %21, %cst_16 [0] : vector<64x32xf32> to vector<32xf32>
    %23 = vector.shape_cast %22 : vector<32xf32> to vector<1x32xf32>
    %cst_17 = arith.constant 1.562500e-02 : f32
    %24 = vector.broadcast %cst_17 : f32 to vector<1x32xf32>
    %25 = arith.mulf %23, %24 : vector<1x32xf32>
    %26 = arith.mulf %20, %20 : vector<1x32xf32>
    %27 = arith.subf %25, %26 : vector<1x32xf32>
    %c40 = arith.constant 40 : index
    %c0_18 = arith.constant 0 : index
    %28 = vector.load %arg2[%c40, %c0_18] : memref<320x32xf32, #tpu.memory_space<vmem>>, vector<1x32xf32>
    %c48 = arith.constant 48 : index
    %c0_19 = arith.constant 0 : index
    %29 = vector.load %arg2[%c48, %c0_19] : memref<320x32xf32, #tpu.memory_space<vmem>>, vector<1x32xf32>
    %cst_20 = arith.constant 9.99999974E-6 : f32
    %30 = vector.broadcast %cst_20 : f32 to vector<1x32xf32>
    %31 = arith.addf %27, %30 : vector<1x32xf32>
    %32 = math.rsqrt %31 : vector<1x32xf32>
    %33 = arith.mulf %28, %32 : vector<1x32xf32>
    %34 = vector.broadcast %33 : vector<1x32xf32> to vector<64x32xf32>
    %35 = arith.mulf %16, %34 : vector<64x32xf32>
    %36 = arith.mulf %20, %33 : vector<1x32xf32>
    %37 = arith.subf %29, %36 : vector<1x32xf32>
    %38 = vector.broadcast %37 : vector<1x32xf32> to vector<64x32xf32>
    %39 = arith.addf %35, %38 : vector<64x32xf32>
    %cst_21 = arith.constant 0.000000e+00 : f32
    %40 = vector.broadcast %cst_21 : f32 to vector<64x32xf32>
    %41 = arith.maximumf %39, %40 : vector<64x32xf32>
    %c1_22 = arith.constant 1 : index
    %c0_23 = arith.constant 0 : index
    %c0_24 = arith.constant 0 : index
    %42 = vector.load %arg1[%c1_22, %c0_23, %c0_24] : memref<2x64x64xf32, #tpu.memory_space<vmem>>, vector<1x64x64xf32>
    %43 = vector.shape_cast %42 : vector<1x64x64xf32> to vector<64x64xf32>
    %cst_25 = arith.constant dense<0.000000e+00> : vector<64x32xf32>
    %44 = tpu.matmul %43, %41, %cst_25 {dimension_numbers = #tpu.dot_dimension_numbers<[1], [0], [0], [1], [0, 0, 1, 1], [], []>} : vector<64x64xf32>, vector<64x32xf32>, vector<64x32xf32> -> vector<64x32xf32>
    %45 = arith.addf %44, %10 : vector<64x32xf32>
    %c96 = arith.constant 96 : index
    %c0_26 = arith.constant 0 : index
    %46 = vector.load %arg2[%c96, %c0_26] : memref<320x32xf32, #tpu.memory_space<vmem>>, vector<32x32xf32>
    %cst_27 = arith.constant dense<0.000000e+00> : vector<64x32xf32>
    %47 = tpu.matmul %45, %46, %cst_27 {dimension_numbers = #tpu.dot_dimension_numbers<[1], [0], [0], [1], [0, 0, 1, 1], [], []>} : vector<64x32xf32>, vector<32x32xf32>, vector<64x32xf32> -> vector<64x32xf32>
    %cst_28 = arith.constant dense<0.000000e+00> : vector<32xf32>
    %48 = vector.multi_reduction <add>, %47, %cst_28 [0] : vector<64x32xf32> to vector<32xf32>
    %49 = vector.shape_cast %48 : vector<32xf32> to vector<1x32xf32>
    %cst_29 = arith.constant 1.562500e-02 : f32
    %50 = vector.broadcast %cst_29 : f32 to vector<1x32xf32>
    %51 = arith.mulf %49, %50 : vector<1x32xf32>
    %52 = arith.mulf %47, %47 : vector<64x32xf32>
    %cst_30 = arith.constant dense<0.000000e+00> : vector<32xf32>
    %53 = vector.multi_reduction <add>, %52, %cst_30 [0] : vector<64x32xf32> to vector<32xf32>
    %54 = vector.shape_cast %53 : vector<32xf32> to vector<1x32xf32>
    %cst_31 = arith.constant 1.562500e-02 : f32
    %55 = vector.broadcast %cst_31 : f32 to vector<1x32xf32>
    %56 = arith.mulf %54, %55 : vector<1x32xf32>
    %57 = arith.mulf %51, %51 : vector<1x32xf32>
    %58 = arith.subf %56, %57 : vector<1x32xf32>
    %c41 = arith.constant 41 : index
    %c0_32 = arith.constant 0 : index
    %59 = vector.load %arg2[%c41, %c0_32] : memref<320x32xf32, #tpu.memory_space<vmem>>, vector<1x32xf32>
    %c49 = arith.constant 49 : index
    %c0_33 = arith.constant 0 : index
    %60 = vector.load %arg2[%c49, %c0_33] : memref<320x32xf32, #tpu.memory_space<vmem>>, vector<1x32xf32>
    %cst_34 = arith.constant 9.99999974E-6 : f32
    %61 = vector.broadcast %cst_34 : f32 to vector<1x32xf32>
    %62 = arith.addf %58, %61 : vector<1x32xf32>
    %63 = math.rsqrt %62 : vector<1x32xf32>
    %64 = arith.mulf %59, %63 : vector<1x32xf32>
    %65 = vector.broadcast %64 : vector<1x32xf32> to vector<64x32xf32>
    %66 = arith.mulf %47, %65 : vector<64x32xf32>
    %67 = arith.mulf %51, %64 : vector<1x32xf32>
    %68 = arith.subf %60, %67 : vector<1x32xf32>
    %69 = vector.broadcast %68 : vector<1x32xf32> to vector<64x32xf32>
    %70 = arith.addf %66, %69 : vector<64x32xf32>
    %cst_35 = arith.constant 0.000000e+00 : f32
    %71 = vector.broadcast %cst_35 : f32 to vector<64x32xf32>
    %72 = arith.maximumf %70, %71 : vector<64x32xf32>
    %c1_36 = arith.constant 1 : index
    %c0_37 = arith.constant 0 : index
    %c0_38 = arith.constant 0 : index
    %73 = vector.load %arg1[%c1_36, %c0_37, %c0_38] : memref<2x64x64xf32, #tpu.memory_space<vmem>>, vector<1x64x64xf32>
    %74 = vector.shape_cast %73 : vector<1x64x64xf32> to vector<64x64xf32>
    %cst_39 = arith.constant dense<0.000000e+00> : vector<64x32xf32>
    %75 = tpu.matmul %74, %72, %cst_39 {dimension_numbers = #tpu.dot_dimension_numbers<[1], [0], [0], [1], [0, 0, 1, 1], [], []>} : vector<64x64xf32>, vector<64x32xf32>, vector<64x32xf32> -> vector<64x32xf32>
    %76 = arith.addf %75, %10 : vector<64x32xf32>
    %c128 = arith.constant 128 : index
    %c0_40 = arith.constant 0 : index
    %77 = vector.load %arg2[%c128, %c0_40] : memref<320x32xf32, #tpu.memory_space<vmem>>, vector<32x32xf32>
    %cst_41 = arith.constant dense<0.000000e+00> : vector<64x32xf32>
    %78 = tpu.matmul %76, %77, %cst_41 {dimension_numbers = #tpu.dot_dimension_numbers<[1], [0], [0], [1], [0, 0, 1, 1], [], []>} : vector<64x32xf32>, vector<32x32xf32>, vector<64x32xf32> -> vector<64x32xf32>
    %cst_42 = arith.constant dense<0.000000e+00> : vector<32xf32>
    %79 = vector.multi_reduction <add>, %78, %cst_42 [0] : vector<64x32xf32> to vector<32xf32>
    %80 = vector.shape_cast %79 : vector<32xf32> to vector<1x32xf32>
    %cst_43 = arith.constant 1.562500e-02 : f32
    %81 = vector.broadcast %cst_43 : f32 to vector<1x32xf32>
    %82 = arith.mulf %80, %81 : vector<1x32xf32>
    %83 = arith.mulf %78, %78 : vector<64x32xf32>
    %cst_44 = arith.constant dense<0.000000e+00> : vector<32xf32>
    %84 = vector.multi_reduction <add>, %83, %cst_44 [0] : vector<64x32xf32> to vector<32xf32>
    %85 = vector.shape_cast %84 : vector<32xf32> to vector<1x32xf32>
    %cst_45 = arith.constant 1.562500e-02 : f32
    %86 = vector.broadcast %cst_45 : f32 to vector<1x32xf32>
    %87 = arith.mulf %85, %86 : vector<1x32xf32>
    %88 = arith.mulf %82, %82 : vector<1x32xf32>
    %89 = arith.subf %87, %88 : vector<1x32xf32>
    %c42 = arith.constant 42 : index
    %c0_46 = arith.constant 0 : index
    %90 = vector.load %arg2[%c42, %c0_46] : memref<320x32xf32, #tpu.memory_space<vmem>>, vector<1x32xf32>
    %c50 = arith.constant 50 : index
    %c0_47 = arith.constant 0 : index
    %91 = vector.load %arg2[%c50, %c0_47] : memref<320x32xf32, #tpu.memory_space<vmem>>, vector<1x32xf32>
    %cst_48 = arith.constant 9.99999974E-6 : f32
    %92 = vector.broadcast %cst_48 : f32 to vector<1x32xf32>
    %93 = arith.addf %89, %92 : vector<1x32xf32>
    %94 = math.rsqrt %93 : vector<1x32xf32>
    %95 = arith.mulf %90, %94 : vector<1x32xf32>
    %96 = vector.broadcast %95 : vector<1x32xf32> to vector<64x32xf32>
    %97 = arith.mulf %78, %96 : vector<64x32xf32>
    %98 = arith.mulf %82, %95 : vector<1x32xf32>
    %99 = arith.subf %91, %98 : vector<1x32xf32>
    %100 = vector.broadcast %99 : vector<1x32xf32> to vector<64x32xf32>
    %101 = arith.addf %97, %100 : vector<64x32xf32>
    %cst_49 = arith.constant 0.000000e+00 : f32
    %102 = vector.broadcast %cst_49 : f32 to vector<64x32xf32>
    %103 = arith.maximumf %101, %102 : vector<64x32xf32>
    %c1_50 = arith.constant 1 : index
    %c0_51 = arith.constant 0 : index
    %c0_52 = arith.constant 0 : index
    %104 = vector.load %arg1[%c1_50, %c0_51, %c0_52] : memref<2x64x64xf32, #tpu.memory_space<vmem>>, vector<1x64x64xf32>
    %105 = vector.shape_cast %104 : vector<1x64x64xf32> to vector<64x64xf32>
    %cst_53 = arith.constant dense<0.000000e+00> : vector<64x32xf32>
    %106 = tpu.matmul %105, %103, %cst_53 {dimension_numbers = #tpu.dot_dimension_numbers<[1], [0], [0], [1], [0, 0, 1, 1], [], []>} : vector<64x64xf32>, vector<64x32xf32>, vector<64x32xf32> -> vector<64x32xf32>
    %107 = arith.addf %106, %10 : vector<64x32xf32>
    %c160 = arith.constant 160 : index
    %c0_54 = arith.constant 0 : index
    %108 = vector.load %arg2[%c160, %c0_54] : memref<320x32xf32, #tpu.memory_space<vmem>>, vector<32x32xf32>
    %cst_55 = arith.constant dense<0.000000e+00> : vector<64x32xf32>
    %109 = tpu.matmul %107, %108, %cst_55 {dimension_numbers = #tpu.dot_dimension_numbers<[1], [0], [0], [1], [0, 0, 1, 1], [], []>} : vector<64x32xf32>, vector<32x32xf32>, vector<64x32xf32> -> vector<64x32xf32>
    %110 = tpu.concatenate %16, %47, %78, %109 in 1 : vector<64x32xf32>, vector<64x32xf32>, vector<64x32xf32>, vector<64x32xf32> -> vector<64x128xf32>
    %c192 = arith.constant 192 : index
    %c0_56 = arith.constant 0 : index
    %111 = vector.load %arg2[%c192, %c0_56] : memref<320x32xf32, #tpu.memory_space<vmem>>, vector<128x32xf32>
    %cst_57 = arith.constant dense<0.000000e+00> : vector<64x32xf32>
    %112 = tpu.matmul %110, %111, %cst_57 {dimension_numbers = #tpu.dot_dimension_numbers<[1], [0], [0], [1], [0, 0, 1, 1], [], []>} : vector<64x128xf32>, vector<128x32xf32>, vector<64x32xf32> -> vector<64x32xf32>
    %c56 = arith.constant 56 : index
    %c0_58 = arith.constant 0 : index
    %113 = vector.load %arg2[%c56, %c0_58] : memref<320x32xf32, #tpu.memory_space<vmem>>, vector<1x32xf32>
    %114 = vector.broadcast %113 : vector<1x32xf32> to vector<64x32xf32>
    %115 = arith.addf %112, %114 : vector<64x32xf32>
    %c0_59 = arith.constant 0 : index
    %c0_60 = arith.constant 0 : index
    %116 = vector.load %arg3[%c0_59, %c0_60] : memref<64x32xf32, #tpu.memory_space<vmem>>, vector<64x32xf32>
    tpu.vector_store %arg3[%c0_59, %c0_60], %115 {strides = array<i32>} : memref<64x32xf32, #tpu.memory_space<vmem>>, vector<64x32xf32>,
    return
  }
}

</mosaic_0001>

<llo_original>
// kernel: tpu_custom_call.1
$region0: #{tpu_custom_call.1}
  #allocation0 [shape = 'u32[]', space=smem, size = 0x4, offset = 0x4, fixed_abs, tag = 'smem constant byte address 0x4 - core index']
  #allocation1 [shape = 'u32[144,128]{1,0:T(1,128)}', space=vmem, size = 0x12000, scoped, tag = 'internal scratch']
  %s0 = inlined_call_operand.vmem [shape: f32[64,32], index: 0, kind: input, shape index: {}]
  %s1 = inlined_call_operand.vmem [shape: f32[2,64,64], index: 1, kind: input, shape index: {}]
  %s2 = inlined_call_operand.vmem [shape: f32[320,32], index: 2, kind: input, shape index: {}]
  %s3 = inlined_call_operand.vmem [shape: f32[64,32], index: 3, kind: output, shape index: {}]
  %s4 = sld [smem:[#allocation0]]
  $region22: #{tpu_custom_call.1} parent=0
    _
  %s6 = ssub.s32 1, %s4
  %s7 = scalar_select 0, %s6, %s4
  // Predicated region
  $region2: #{tpu_custom_call.1} parent=0 // pred_check
    _
  $region3: #{tpu_custom_call.1} parent=0 // pred_check_branch
    %9 = sbr.rel (0) target = $region5
  $region4: #{tpu_custom_call.1} parent=0 // pred_region
    _
  $region5: #{tpu_custom_call.1} parent=0 // pred_fallthru
    _
  // Predicated region
  $region6: #{tpu_custom_call.1} parent=0 // pred_check
    _
  $region7: #{tpu_custom_call.1} parent=0 // pred_check_branch
    %11 = sbr.rel (0) target = $region9
  $region8: #{tpu_custom_call.1} parent=0 // pred_region
    _
  $region9: #{tpu_custom_call.1} parent=0 // pred_fallthru
    _
  // Predicated region
  $region10: #{tpu_custom_call.1} parent=0 // pred_check
    _
  $region11: #{tpu_custom_call.1} parent=0 // pred_check_branch
    %13 = sbr.rel (0) target = $region13
  $region12: #{tpu_custom_call.1} parent=0 // pred_region
    _
  $region13: #{tpu_custom_call.1} parent=0 // pred_fallthru
    _
  %v14 = vld [vmem:[%s0] sm:$0xff]
  %v15 = vld [vmem:[%s0 + $0x8] sm:$0xff]
  %v16 = vld [vmem:[%s0 + $0x10] sm:$0xff]
  %v17 = vld [vmem:[%s0 + $0x18] sm:$0xff]
  %v18 = vld [vmem:[%s0 + $0x20] sm:$0xff]
  %v19 = vld [vmem:[%s0 + $0x28] sm:$0xff]
  %v20 = vld [vmem:[%s0 + $0x30] sm:$0xff]
  %v21 = vld [vmem:[%s0 + $0x38] sm:$0xff]
  %v22 = vld [vmem:[%s2] sm:$0xff]
  %v23 = vld [vmem:[%s2 + $0x8] sm:$0xff]
  %v24 = vld [vmem:[%s2 + $0x10] sm:$0xff]
  %v25 = vld [vmem:[%s2 + $0x18] sm:$0xff]
  %vm26 = vcmask 261120
  %v28 = vsel %vm26, %v14, 0
  %v31 = vsel %vm26, %v15, 0
  %v34 = vsel %vm26, %v16, 0
  %v37 = vsel %vm26, %v17, 0
  %v40 = vsel %vm26, %v18, 0
  %v43 = vsel %vm26, %v19, 0
  %v46 = vsel %vm26, %v20, 0
  %v49 = vsel %vm26, %v21, 0
  %51 = vmatprep.subr.mxu0 0.0
  %52 = vmatpush1.msra.mxu0 %v22
  %53 = vmatprep.subr.mxu0 0.0
  %54 = vmatpush1.msra.mxu0 %v23
  %55 = vmatprep.subr.mxu0 0.0
  %56 = vmatpush1.msra.mxu0 %v24
  %57 = vmatprep.subr.mxu0 0.0
  %58 = vmatpush1.msra.mxu0 %v25
  %59 = vmatprep.subr.mxu0 0.0
  %60 = vmatpush1.msra.mxu0 0.0
  %61 = vmatprep.subr.mxu0 0.0
  %62 = vmatpush1.msra.mxu0 0.0
  %63 = vmatprep.subr.mxu0 0.0
  %64 = vmatpush1.msra.mxu0 0.0
  %65 = vmatprep.subr.mxu0 0.0
  %66 = vmatpush1.msra.mxu0 0.0
  %67 = vmatprep.subr.mxu0 0.0
  %68 = vmatpush1.msra.mxu0 0.0
  %69 = vmatprep.subr.mxu0 0.0
  %70 = vmatpush1.msra.mxu0 0.0
  %71 = vmatprep.subr.mxu0 0.0
  %72 = vmatpush1.msra.mxu0 0.0
  %73 = vmatprep.subr.mxu0 0.0
  %74 = vmatpush1.msra.mxu0 0.0
  %75 = vmatprep.subr.mxu0 0.0
  %76 = vmatpush1.msra.mxu0 0.0
  %77 = vmatprep.subr.mxu0 0.0
  %78 = vmatpush1.msra.mxu0 0.0
  %79 = vmatprep.subr.mxu0 0.0
  %80 = vmatpush1.msra.mxu0 0.0
  %81 = vmatprep.subr.mxu0 0.0
  %82 = vmatpush1.msra.mxu0 0.0
  %83 = vmatprep.subr.mxu0 0.0
  %84 = vmatpush1.msra.mxu0 0.0
  %85 = vmatprep.subr.mxu0 0.0
  %86 = vmatpush1.msra.mxu0 0.0
  %87 = vmatprep.subr.mxu0 0.0
  %88 = vmatpush1.msra.mxu0 0.0
  %89 = vmatprep.subr.mxu0 0.0
  %90 = vmatpush1.msra.mxu0 0.0
  %91 = vmatprep.subr.mxu0 0.0
  %92 = vmatpush1.msra.mxu0 0.0
  %93 = vmatprep.subr.mxu0 0.0
  %94 = vmatpush1.msra.mxu0 0.0
  %95 = vmatprep.subr.mxu0 0.0
  %96 = vmatpush1.msra.mxu0 0.0
  %97 = vmatprep.subr.mxu0 0.0
  %98 = vmatpush1.msra.mxu0 0.0
  %99 = vmatprep.subr.mxu0 0.0
  %100 = vmatpush1.msra.mxu0 0.0
  %101 = vmatprep.subr.mxu0 0.0
  %102 = vmatpush1.msra.mxu0 0.0
  %103 = vmatprep.subr.mxu0 0.0
  %104 = vmatpush1.msra.mxu0 0.0
  %105 = vmatprep.subr.mxu0 0.0
  %106 = vmatpush1.msra.mxu0 0.0
  %107 = vmatprep.subr.mxu0 0.0
  %108 = vmatpush1.msra.mxu0 0.0
  %109 = vmatprep.subr.mxu0 0.0
  %110 = vmatpush1.msra.mxu0 0.0
  %111 = vmatprep.subr.mxu0 0.0
  %112 = vmatpush1.msra.mxu0 0.0
  %113 = vmatprep.subr.mxu0 0.0
  %114 = vmatpush1.msra.mxu0 0.0
  %115 = vmatprep.mubr.f32.mxu0 0.0
  %116 = vmatmul.mubr.f32.gmra.mrb[0].mxu0 %v28
  %v117 = vpop.f32.mrb[0].mxu0
  %v118 = vadd.f32 0.0, %v117
  %v119 = vpop.f32.mrb[0].mxu0
  %120 = vmatprep.mubr.f32.mxu0 0.0
  %121 = vmatmul.mubr.f32.gmra.mrb[0].mxu0 %v31
  %v122 = vpop.f32.mrb[0].mxu0
  %v123 = vadd.f32 0.0, %v122
  %v124 = vpop.f32.mrb[0].mxu0
  %125 = vmatprep.mubr.f32.mxu0 0.0
  %126 = vmatmul.mubr.f32.gmra.mrb[0].mxu0 %v34
  %v127 = vpop.f32.mrb[0].mxu0
  %v128 = vadd.f32 0.0, %v127
  %v129 = vpop.f32.mrb[0].mxu0
  %130 = vmatprep.mubr.f32.mxu0 0.0
  %131 = vmatmul.mubr.f32.gmra.mrb[0].mxu0 %v37
  %v132 = vpop.f32.mrb[0].mxu0
  %v133 = vadd.f32 0.0, %v132
  %v134 = vpop.f32.mrb[0].mxu0
  %135 = vmatprep.mubr.f32.mxu0 0.0
  %136 = vmatmul.mubr.f32.gmra.mrb[0].mxu0 %v40
  %v137 = vpop.f32.mrb[0].mxu0
  %v138 = vadd.f32 0.0, %v137
  %v139 = vpop.f32.mrb[0].mxu0
  %140 = vmatprep.mubr.f32.mxu0 0.0
  %141 = vmatmul.mubr.f32.gmra.mrb[0].mxu0 %v43
  %v142 = vpop.f32.mrb[0].mxu0
  %v143 = vadd.f32 0.0, %v142
  %v144 = vpop.f32.mrb[0].mxu0
  %145 = vmatprep.mubr.f32.mxu0 0.0
  %146 = vmatmul.mubr.f32.gmra.mrb[0].mxu0 %v46
  %v147 = vpop.f32.mrb[0].mxu0
  %v148 = vadd.f32 0.0, %v147
  %v149 = vpop.f32.mrb[0].mxu0
  %150 = vmatprep.mubr.f32.mxu0 0.0
  %151 = vmatmul.mubr.f32.gmra.mrb[0].mxu0 %v49
  %v152 = vpop.f32.mrb[0].mxu0
  %v153 = vadd.f32 0.0, %v152
  %v154 = vpop.f32.mrb[0].mxu0
  %155 = vdwg.mxu0
  %v156 = vld [vmem:[%s1] sm:$0xff]
  %v157 = vld [vmem:[%s1 + $0x8] sm:$0xff]
  %v158 = vld [vmem:[%s1 + $0x10] sm:$0xff]
  %v159 = vld [vmem:[%s1 + $0x18] sm:$0xff]
  %v160 = vld [vmem:[%s1 + $0x20] sm:$0xff]
  %v161 = vld [vmem:[%s1 + $0x28] sm:$0xff]
  %v162 = vld [vmem:[%s1 + $0x30] sm:$0xff]
  %v163 = vld [vmem:[%s1 + $0x38] sm:$0xff]
  %v164 = vld [vmem:[%s2 + $0x20] sm:$0x1]
  %v165 = vlaneseq
  %v166 = vshrl.u32 %v165, 7
  %v167 = vsub.s32 0, %v166
  %v168 = vrot.slane %v164, %v167
  %vm169 = vcmask 523264
  %v171 = vsel %vm169, %v156, 0
  %v174 = vsel %vm169, %v157, 0
  %v177 = vsel %vm169, %v158, 0
  %v180 = vsel %vm169, %v159, 0
  %v183 = vsel %vm169, %v160, 0
  %v186 = vsel %vm169, %v161, 0
  %v189 = vsel %vm169, %v162, 0
  %v192 = vsel %vm169, %v163, 0
  %194 = vmatprep.subr.mxu0 0.0
  %195 = vmatpush1.msra.mxu0 %v118
  %196 = vmatprep.subr.mxu0 0.0
  %197 = vmatpush1.msra.mxu0 %v123
  %198 = vmatprep.subr.mxu0 0.0
  %199 = vmatpush1.msra.mxu0 %v128
  %200 = vmatprep.subr.mxu0 0.0
  %201 = vmatpush1.msra.mxu0 %v133
  %202 = vmatprep.subr.mxu0 0.0
  %203 = vmatpush1.msra.mxu0 %v138
  %204 = vmatprep.subr.mxu0 0.0
  %205 = vmatpush1.msra.mxu0 %v143
  %206 = vmatprep.subr.mxu0 0.0
  %207 = vmatpush1.msra.mxu0 %v148
  %208 = vmatprep.subr.mxu0 0.0
  %209 = vmatpush1.msra.mxu0 %v153
  %210 = vmatprep.subr.mxu0 0.0
  %211 = vmatpush1.msra.mxu0 0.0
  %212 = vmatprep.subr.mxu0 0.0
  %213 = vmatpush1.msra.mxu0 0.0
  %214 = vmatprep.subr.mxu0 0.0
  %215 = vmatpush1.msra.mxu0 0.0
  %216 = vmatprep.subr.mxu0 0.0
  %217 = vmatpush1.msra.mxu0 0.0
  %218 = vmatprep.subr.mxu0 0.0
  %219 = vmatpush1.msra.mxu0 0.0
  %220 = vmatprep.subr.mxu0 0.0
  %221 = vmatpush1.msra.mxu0 0.0
  %222 = vmatprep.subr.mxu0 0.0
  %223 = vmatpush1.msra.mxu0 0.0
  %224 = vmatprep.subr.mxu0 0.0
  %225 = vmatpush1.msra.mxu0 0.0
  %226 = vmatprep.subr.mxu0 0.0
  %227 = vmatpush1.msra.mxu0 0.0
  %228 = vmatprep.subr.mxu0 0.0
  %229 = vmatpush1.msra.mxu0 0.0
  %230 = vmatprep.subr.mxu0 0.0
  %231 = vmatpush1.msra.mxu0 0.0
  %232 = vmatprep.subr.mxu0 0.0
  %233 = vmatpush1.msra.mxu0 0.0
  %234 = vmatprep.subr.mxu0 0.0
  %235 = vmatpush1.msra.mxu0 0.0
  %236 = vmatprep.subr.mxu0 0.0
  %237 = vmatpush1.msra.mxu0 0.0
  %238 = vmatprep.subr.mxu0 0.0
  %239 = vmatpush1.msra.mxu0 0.0
  %240 = vmatprep.subr.mxu0 0.0
  %241 = vmatpush1.msra.mxu0 0.0
  %242 = vmatprep.subr.mxu0 0.0
  %243 = vmatpush1.msra.mxu0 0.0
  %244 = vmatprep.subr.mxu0 0.0
  %245 = vmatpush1.msra.mxu0 0.0
  %246 = vmatprep.subr.mxu0 0.0
  %247 = vmatpush1.msra.mxu0 0.0
  %248 = vmatprep.subr.mxu0 0.0
  %249 = vmatpush1.msra.mxu0 0.0
  %250 = vmatprep.subr.mxu0 0.0
  %251 = vmatpush1.msra.mxu0 0.0
  %252 = vmatprep.subr.mxu0 0.0
  %253 = vmatpush1.msra.mxu0 0.0
  %254 = vmatprep.subr.mxu0 0.0
  %255 = vmatpush1.msra.mxu0 0.0
  %256 = vmatprep.subr.mxu0 0.0
  %257 = vmatpush1.msra.mxu0 0.0
  %258 = vmatprep.mubr.f32.mxu0 0.0
  %259 = vmatmul.mubr.f32.gmra.mrb[0].mxu0 %v171
  %v260 = vpop.f32.mrb[0].mxu0
  %v261 = vadd.f32 %v168, %v260
  %v262 = vpop.f32.mrb[0].mxu0
  %263 = vmatprep.mubr.f32.mxu0 0.0
  %264 = vmatmul.mubr.f32.gmra.mrb[0].mxu0 %v174
  %v265 = vpop.f32.mrb[0].mxu0
  %v266 = vadd.f32 %v168, %v265
  %v267 = vpop.f32.mrb[0].mxu0
  %268 = vmatprep.mubr.f32.mxu0 0.0
  %269 = vmatmul.mubr.f32.gmra.mrb[0].mxu0 %v177
  %v270 = vpop.f32.mrb[0].mxu0
  %v271 = vadd.f32 %v168, %v270
  %v272 = vpop.f32.mrb[0].mxu0
  %273 = vmatprep.mubr.f32.mxu0 0.0
  %274 = vmatmul.mubr.f32.gmra.mrb[0].mxu0 %v180
  %v275 = vpop.f32.mrb[0].mxu0
  %v276 = vadd.f32 %v168, %v275
  %v277 = vpop.f32.mrb[0].mxu0
  %278 = vmatprep.mubr.f32.mxu0 0.0
  %279 = vmatmul.mubr.f32.gmra.mrb[0].mxu0 %v183
  %v280 = vpop.f32.mrb[0].mxu0
  %v281 = vadd.f32 %v168, %v280
  %v282 = vpop.f32.mrb[0].mxu0
  %283 = vmatprep.mubr.f32.mxu0 0.0
  %284 = vmatmul.mubr.f32.gmra.mrb[0].mxu0 %v186
  %v285 = vpop.f32.mrb[0].mxu0
  %v286 = vadd.f32 %v168, %v285
  %v287 = vpop.f32.mrb[0].mxu0
  %288 = vmatprep.mubr.f32.mxu0 0.0
  %289 = vmatmul.mubr.f32.gmra.mrb[0].mxu0 %v189
  %v290 = vpop.f32.mrb[0].mxu0
  %v291 = vadd.f32 %v168, %v290
  %v292 = vpop.f32.mrb[0].mxu0
  %293 = vmatprep.mubr.f32.mxu0 0.0
  %294 = vmatmul.mubr.f32.gmra.mrb[0].mxu0 %v192
  %v295 = vpop.f32.mrb[0].mxu0
  %v296 = vadd.f32 %v168, %v295
  %v297 = vpop.f32.mrb[0].mxu0
  %298 = vdwg.mxu0
  %v299 = vmul.f32 %v261, 0.1
  %v300 = vmul.f32 %v266, 0.1
  %v301 = vmul.f32 %v271, 0.1
  %v302 = vmul.f32 %v276, 0.1
  %v303 = vmul.f32 %v281, 0.1
  %v304 = vmul.f32 %v286, 0.1
  %v305 = vmul.f32 %v291, 0.1
  %v306 = vmul.f32 %v296, 0.1
  %s307 = scalar_lea.vmem %s1, 64
  %v308 = vld [vmem:[%s307] sm:$0xff]
  %v309 = vld [vmem:[%s307 + $0x8] sm:$0xff]
  %v310 = vld [vmem:[%s307 + $0x10] sm:$0xff]
  %v311 = vld [vmem:[%s307 + $0x18] sm:$0xff]
  %v312 = vld [vmem:[%s307 + $0x20] sm:$0xff]
  %v313 = vld [vmem:[%s307 + $0x28] sm:$0xff]
  %v314 = vld [vmem:[%s307 + $0x30] sm:$0xff]
  %v315 = vld [vmem:[%s307 + $0x38] sm:$0xff]
  %v317 = vsel %vm169, %v308, 0
  %v320 = vsel %vm169, %v309, 0
  %v323 = vsel %vm169, %v310, 0
  %v326 = vsel %vm169, %v311, 0
  %v329 = vsel %vm169, %v312, 0
  %v332 = vsel %vm169, %v313, 0
  %v335 = vsel %vm169, %v314, 0
  %v338 = vsel %vm169, %v315, 0
  %340 = vmatprep.subr.mxu0 0.0
  %341 = vmatpush1.msra.mxu0 %v261
  %342 = vmatprep.subr.mxu0 0.0
  %343 = vmatpush1.msra.mxu0 %v266
  %344 = vmatprep.subr.mxu0 0.0
  %345 = vmatpush1.msra.mxu0 %v271
  %346 = vmatprep.subr.mxu0 0.0
  %347 = vmatpush1.msra.mxu0 %v276
  %348 = vmatprep.subr.mxu0 0.0
  %349 = vmatpush1.msra.mxu0 %v281
  %350 = vmatprep.subr.mxu0 0.0
  %351 = vmatpush1.msra.mxu0 %v286
  %352 = vmatprep.subr.mxu0 0.0
  %353 = vmatpush1.msra.mxu0 %v291
  %354 = vmatprep.subr.mxu0 0.0
  %355 = vmatpush1.msra.mxu0 %v296
  %356 = vmatprep.subr.mxu0 0.0
  %357 = vmatpush1.msra.mxu0 0.0
  %358 = vmatprep.subr.mxu0 0.0
  %359 = vmatpush1.msra.mxu0 0.0
  %360 = vmatprep.subr.mxu0 0.0
  %361 = vmatpush1.msra.mxu0 0.0
  %362 = vmatprep.subr.mxu0 0.0
  %363 = vmatpush1.msra.mxu0 0.0
  %364 = vmatprep.subr.mxu0 0.0
  %365 = vmatpush1.msra.mxu0 0.0
  %366 = vmatprep.subr.mxu0 0.0
  %367 = vmatpush1.msra.mxu0 0.0
  %368 = vmatprep.subr.mxu0 0.0
  %369 = vmatpush1.msra.mxu0 0.0
  %370 = vmatprep.subr.mxu0 0.0
  %371 = vmatpush1.msra.mxu0 0.0
  %372 = vmatprep.subr.mxu0 0.0
  %373 = vmatpush1.msra.mxu0 0.0
  %374 = vmatprep.subr.mxu0 0.0
  %375 = vmatpush1.msra.mxu0 0.0
  %376 = vmatprep.subr.mxu0 0.0
  %377 = vmatpush1.msra.mxu0 0.0
  %378 = vmatprep.subr.mxu0 0.0
  %379 = vmatpush1.msra.mxu0 0.0
  %380 = vmatprep.subr.mxu0 0.0
  %381 = vmatpush1.msra.mxu0 0.0
  %382 = vmatprep.subr.mxu0 0.0
  %383 = vmatpush1.msra.mxu0 0.0
  %384 = vmatprep.subr.mxu0 0.0
  %385 = vmatpush1.msra.mxu0 0.0
  %386 = vmatprep.subr.mxu0 0.0
  %387 = vmatpush1.msra.mxu0 0.0
  %388 = vmatprep.subr.mxu0 0.0
  %389 = vmatpush1.msra.mxu0 0.0
  %390 = vmatprep.subr.mxu0 0.0
  %391 = vmatpush1.msra.mxu0 0.0
  %392 = vmatprep.subr.mxu0 0.0
  %393 = vmatpush1.msra.mxu0 0.0
  %394 = vmatprep.subr.mxu0 0.0
  %395 = vmatpush1.msra.mxu0 0.0
  %396 = vmatprep.subr.mxu0 0.0
  %397 = vmatpush1.msra.mxu0 0.0
  %398 = vmatprep.subr.mxu0 0.0
  %399 = vmatpush1.msra.mxu0 0.0
  %400 = vmatprep.subr.mxu0 0.0
  %401 = vmatpush1.msra.mxu0 0.0
  %402 = vmatprep.subr.mxu0 0.0
  %403 = vmatpush1.msra.mxu0 0.0
  %404 = vmatprep.mubr.f32.mxu0 0.0
  %405 = vmatmul.mubr.f32.gmra.mrb[0].mxu0 %v317
  %v406 = vpop.f32.mrb[0].mxu0
  %v407 = vadd.f32 %v299, %v406
  %v408 = vpop.f32.mrb[0].mxu0
  %409 = vmatprep.mubr.f32.mxu0 0.0
  %410 = vmatmul.mubr.f32.gmra.mrb[0].mxu0 %v320
  %v411 = vpop.f32.mrb[0].mxu0
  %v412 = vadd.f32 %v300, %v411
  %v413 = vpop.f32.mrb[0].mxu0
  %414 = vmatprep.mubr.f32.mxu0 0.0
  %415 = vmatmul.mubr.f32.gmra.mrb[0].mxu0 %v323
  %v416 = vpop.f32.mrb[0].mxu0
  %v417 = vadd.f32 %v301, %v416
  %v418 = vpop.f32.mrb[0].mxu0
  %419 = vmatprep.mubr.f32.mxu0 0.0
  %420 = vmatmul.mubr.f32.gmra.mrb[0].mxu0 %v326
  %v421 = vpop.f32.mrb[0].mxu0
  %v422 = vadd.f32 %v302, %v421
  %v423 = vpop.f32.mrb[0].mxu0
  %424 = vmatprep.mubr.f32.mxu0 0.0
  %425 = vmatmul.mubr.f32.gmra.mrb[0].mxu0 %v329
  %v426 = vpop.f32.mrb[0].mxu0
  %v427 = vadd.f32 %v303, %v426
  %v428 = vpop.f32.mrb[0].mxu0
  %429 = vmatprep.mubr.f32.mxu0 0.0
  %430 = vmatmul.mubr.f32.gmra.mrb[0].mxu0 %v332
  %v431 = vpop.f32.mrb[0].mxu0
  %v432 = vadd.f32 %v304, %v431
  %v433 = vpop.f32.mrb[0].mxu0
  %434 = vmatprep.mubr.f32.mxu0 0.0
  %435 = vmatmul.mubr.f32.gmra.mrb[0].mxu0 %v335
  %v436 = vpop.f32.mrb[0].mxu0
  %v437 = vadd.f32 %v305, %v436
  %v438 = vpop.f32.mrb[0].mxu0
  %439 = vmatprep.mubr.f32.mxu0 0.0
  %440 = vmatmul.mubr.f32.gmra.mrb[0].mxu0 %v338
  %v441 = vpop.f32.mrb[0].mxu0
  %v442 = vadd.f32 %v306, %v441
  %v443 = vpop.f32.mrb[0].mxu0
  %444 = vdwg.mxu0
  %v445 = vld [vmem:[%s2 + $0x40] sm:$0xff]
  %v446 = vld [vmem:[%s2 + $0x48] sm:$0xff]
  %v447 = vld [vmem:[%s2 + $0x50] sm:$0xff]
  %v448 = vld [vmem:[%s2 + $0x58] sm:$0xff]
  %v450 = vsel %vm26, %v407, 0
  %v453 = vsel %vm26, %v412, 0
  %v456 = vsel %vm26, %v417, 0
  %v459 = vsel %vm26, %v422, 0
  %v462 = vsel %vm26, %v427, 0
  %v465 = vsel %vm26, %v432, 0
  %v468 = vsel %vm26, %v437, 0
  %v471 = vsel %vm26, %v442, 0
  %473 = vmatprep.subr.mxu0 0.0
  %474 = vmatpush1.msra.mxu0 %v445
  %475 = vmatprep.subr.mxu0 0.0
  %476 = vmatpush1.msra.mxu0 %v446
  %477 = vmatprep.subr.mxu0 0.0
  %478 = vmatpush1.msra.mxu0 %v447
  %479 = vmatprep.subr.mxu0 0.0
  %480 = vmatpush1.msra.mxu0 %v448
  %481 = vmatprep.subr.mxu0 0.0
  %482 = vmatpush1.msra.mxu0 0.0
  %483 = vmatprep.subr.mxu0 0.0
  %484 = vmatpush1.msra.mxu0 0.0
  %485 = vmatprep.subr.mxu0 0.0
  %486 = vmatpush1.msra.mxu0 0.0
  %487 = vmatprep.subr.mxu0 0.0
  %488 = vmatpush1.msra.mxu0 0.0
  %489 = vmatprep.subr.mxu0 0.0
  %490 = vmatpush1.msra.mxu0 0.0
  %491 = vmatprep.subr.mxu0 0.0
  %492 = vmatpush1.msra.mxu0 0.0
  %493 = vmatprep.subr.mxu0 0.0
  %494 = vmatpush1.msra.mxu0 0.0
  %495 = vmatprep.subr.mxu0 0.0
  %496 = vmatpush1.msra.mxu0 0.0
  %497 = vmatprep.subr.mxu0 0.0
  %498 = vmatpush1.msra.mxu0 0.0
  %499 = vmatprep.subr.mxu0 0.0
  %500 = vmatpush1.msra.mxu0 0.0
  %501 = vmatprep.subr.mxu0 0.0
  %502 = vmatpush1.msra.mxu0 0.0
  %503 = vmatprep.subr.mxu0 0.0
  %504 = vmatpush1.msra.mxu0 0.0
  %505 = vmatprep.subr.mxu0 0.0
  %506 = vmatpush1.msra.mxu0 0.0
  %507 = vmatprep.subr.mxu0 0.0
  %508 = vmatpush1.msra.mxu0 0.0
  %509 = vmatprep.subr.mxu0 0.0
  %510 = vmatpush1.msra.mxu0 0.0
  %511 = vmatprep.subr.mxu0 0.0
  %512 = vmatpush1.msra.mxu0 0.0
  %513 = vmatprep.subr.mxu0 0.0
  %514 = vmatpush1.msra.mxu0 0.0
  %515 = vmatprep.subr.mxu0 0.0
  %516 = vmatpush1.msra.mxu0 0.0
  %517 = vmatprep.subr.mxu0 0.0
  %518 = vmatpush1.msra.mxu0 0.0
  %519 = vmatprep.subr.mxu0 0.0
  %520 = vmatpush1.msra.mxu0 0.0
  %521 = vmatprep.subr.mxu0 0.0
  %522 = vmatpush1.msra.mxu0 0.0
  %523 = vmatprep.subr.mxu0 0.0
  %524 = vmatpush1.msra.mxu0 0.0
  %525 = vmatprep.subr.mxu0 0.0
  %526 = vmatpush1.msra.mxu0 0.0
  %527 = vmatprep.subr.mxu0 0.0
  %528 = vmatpush1.msra.mxu0 0.0
  %529 = vmatprep.subr.mxu0 0.0
  %530 = vmatpush1.msra.mxu0 0.0
  %531 = vmatprep.subr.mxu0 0.0
  %532 = vmatpush1.msra.mxu0 0.0
  %533 = vmatprep.subr.mxu0 0.0
  %534 = vmatpush1.msra.mxu0 0.0
  %535 = vmatprep.subr.mxu0 0.0
  %536 = vmatpush1.msra.mxu0 0.0
  %537 = vmatprep.mubr.f32.mxu0 0.0
  %538 = vmatmul.mubr.f32.gmra.mrb[0].mxu0 %v450
  %v539 = vpop.f32.mrb[0].mxu0
  %v540 = vadd.f32 0.0, %v539
  %v541 = vpop.f32.mrb[0].mxu0
  %542 = vmatprep.mubr.f32.mxu0 0.0
  %543 = vmatmul.mubr.f32.gmra.mrb[0].mxu0 %v453
  %v544 = vpop.f32.mrb[0].mxu0
  %v545 = vadd.f32 0.0, %v544
  %v546 = vpop.f32.mrb[0].mxu0
  %547 = vmatprep.mubr.f32.mxu0 0.0
  %548 = vmatmul.mubr.f32.gmra.mrb[0].mxu0 %v456
  %v549 = vpop.f32.mrb[0].mxu0
  %v550 = vadd.f32 0.0, %v549
  %v551 = vpop.f32.mrb[0].mxu0
  %552 = vmatprep.mubr.f32.mxu0 0.0
  %553 = vmatmul.mubr.f32.gmra.mrb[0].mxu0 %v459
  %v554 = vpop.f32.mrb[0].mxu0
  %v555 = vadd.f32 0.0, %v554
  %v556 = vpop.f32.mrb[0].mxu0
  %557 = vmatprep.mubr.f32.mxu0 0.0
  %558 = vmatmul.mubr.f32.gmra.mrb[0].mxu0 %v462
  %v559 = vpop.f32.mrb[0].mxu0
  %v560 = vadd.f32 0.0, %v559
  %v561 = vpop.f32.mrb[0].mxu0
  %562 = vmatprep.mubr.f32.mxu0 0.0
  %563 = vmatmul.mubr.f32.gmra.mrb[0].mxu0 %v465
  %v564 = vpop.f32.mrb[0].mxu0
  %v565 = vadd.f32 0.0, %v564
  %v566 = vpop.f32.mrb[0].mxu0
  %567 = vmatprep.mubr.f32.mxu0 0.0
  %568 = vmatmul.mubr.f32.gmra.mrb[0].mxu0 %v468
  %v569 = vpop.f32.mrb[0].mxu0
  %v570 = vadd.f32 0.0, %v569
  %v571 = vpop.f32.mrb[0].mxu0
  %572 = vmatprep.mubr.f32.mxu0 0.0
  %573 = vmatmul.mubr.f32.gmra.mrb[0].mxu0 %v471
  %v574 = vpop.f32.mrb[0].mxu0
  %v575 = vadd.f32 0.0, %v574
  %v576 = vpop.f32.mrb[0].mxu0
  %577 = vdwg.mxu0
  %v578 = vsel %vm26, %v540, 0.0
  %v579 = vsel %vm26, %v545, 0.0
  %v580 = vadd.f32 %v578, %v579
  %v581 = vsel %vm26, %v550, 0.0
  %v582 = vadd.f32 %v580, %v581
  %v583 = vsel %vm26, %v555, 0.0
  %v584 = vadd.f32 %v582, %v583
  %v585 = vsel %vm26, %v560, 0.0
  %v586 = vadd.f32 %v584, %v585
  %v587 = vsel %vm26, %v565, 0.0
  %v588 = vadd.f32 %v586, %v587
  %v589 = vsel %vm26, %v570, 0.0
  %v590 = vadd.f32 %v588, %v589
  %v591 = vsel %vm26, %v575, 0.0
  %v592 = vadd.f32 %v590, %v591
  %v593 = vrot.slane %v592, 4
  %v594 = vadd.f32 %v592, %v593
  %v595 = vrot.slane %v594, 2
  %v596 = vadd.f32 %v594, %v595
  %v597 = vrot.slane %v596, 1
  %v598 = vadd.f32 %v596, %v597
  %v599 = vmul.f32 %v598, 0.015625
  %v600 = vmul.f32 %v540, %v540
  %v601 = vmul.f32 %v545, %v545
  %v602 = vmul.f32 %v550, %v550
  %v603 = vmul.f32 %v555, %v555
  %v604 = vmul.f32 %v560, %v560
  %v605 = vmul.f32 %v565, %v565
  %v606 = vmul.f32 %v570, %v570
  %v607 = vmul.f32 %v575, %v575
  %v608 = vsel %vm26, %v600, 0.0
  %v609 = vsel %vm26, %v601, 0.0
  %v610 = vadd.f32 %v608, %v609
  %v611 = vsel %vm26, %v602, 0.0
  %v612 = vadd.f32 %v610, %v611
  %v613 = vsel %vm26, %v603, 0.0
  %v614 = vadd.f32 %v612, %v613
  %v615 = vsel %vm26, %v604, 0.0
  %v616 = vadd.f32 %v614, %v615
  %v617 = vsel %vm26, %v605, 0.0
  %v618 = vadd.f32 %v616, %v617
  %v619 = vsel %vm26, %v606, 0.0
  %v620 = vadd.f32 %v618, %v619
  %v621 = vsel %vm26, %v607, 0.0
  %v622 = vadd.f32 %v620, %v621
  %v623 = vrot.slane %v622, 4
  %v624 = vadd.f32 %v622, %v623
  %v625 = vrot.slane %v624, 2
  %v626 = vadd.f32 %v624, %v625
  %v627 = vrot.slane %v626, 1
  %v628 = vadd.f32 %v626, %v627
  %v629 = vmul.f32 %v628, 0.015625
  %v630 = vmul.f32 %v599, %v599
  %v631 = vsub.f32 %v629, %v630
  %v632 = vld [vmem:[%s2 + $0x28] sm:$0x1]
  %v633 = vld [vmem:[%s2 + $0x30] sm:$0x1]
  %v634 = vadd.f32 %v631, 1e-05
  %v635 = vrsqrt.pop %v634
  %v636 = vmul.f32 %v632, %v635
  %v637 = vlaneseq
  %v638 = vshrl.u32 %v637, 7
  %v639 = vsub.s32 0, %v638
  %v640 = vrot.slane %v636, %v639
  %v641 = vmul.f32 %v540, %v640
  %v642 = vmul.f32 %v545, %v640
  %v643 = vmul.f32 %v550, %v640
  %v644 = vmul.f32 %v555, %v640
  %v645 = vmul.f32 %v560, %v640
  %v646 = vmul.f32 %v565, %v640
  %v647 = vmul.f32 %v570, %v640
  %v648 = vmul.f32 %v575, %v640
  %v649 = vmul.f32 %v599, %v636
  %v650 = vsub.f32 %v633, %v649
  %v651 = vlaneseq
  %v652 = vshrl.u32 %v651, 7
  %v653 = vsub.s32 0, %v652
  %v654 = vrot.slane %v650, %v653
  %v655 = vadd.f32 %v641, %v654
  %v656 = vadd.f32 %v642, %v654
  %v657 = vadd.f32 %v643, %v654
  %v658 = vadd.f32 %v644, %v654
  %v659 = vadd.f32 %v645, %v654
  %v660 = vadd.f32 %v646, %v654
  %v661 = vadd.f32 %v647, %v654
  %v662 = vadd.f32 %v648, %v654
  %v663 = vmax.f32 %v655, 0.0
  %v664 = vmax.f32 %v656, 0.0
  %v665 = vmax.f32 %v657, 0.0
  %v666 = vmax.f32 %v658, 0.0
  %v667 = vmax.f32 %v659, 0.0
  %v668 = vmax.f32 %v660, 0.0
  %v669 = vmax.f32 %v661, 0.0
  %v670 = vmax.f32 %v662, 0.0
  %671 = vmatprep.subr.mxu0 0.0
  %672 = vmatpush1.msra.mxu0 %v663
  %673 = vmatprep.subr.mxu0 0.0
  %674 = vmatpush1.msra.mxu0 %v664
  %675 = vmatprep.subr.mxu0 0.0
  %676 = vmatpush1.msra.mxu0 %v665
  %677 = vmatprep.subr.mxu0 0.0
  %678 = vmatpush1.msra.mxu0 %v666
  %679 = vmatprep.subr.mxu0 0.0
  %680 = vmatpush1.msra.mxu0 %v667
  %681 = vmatprep.subr.mxu0 0.0
  %682 = vmatpush1.msra.mxu0 %v668
  %683 = vmatprep.subr.mxu0 0.0
  %684 = vmatpush1.msra.mxu0 %v669
  %685 = vmatprep.subr.mxu0 0.0
  %686 = vmatpush1.msra.mxu0 %v670
  %687 = vmatprep.subr.mxu0 0.0
  %688 = vmatpush1.msra.mxu0 0.0
  %689 = vmatprep.subr.mxu0 0.0
  %690 = vmatpush1.msra.mxu0 0.0
  %691 = vmatprep.subr.mxu0 0.0
  %692 = vmatpush1.msra.mxu0 0.0
  %693 = vmatprep.subr.mxu0 0.0
  %694 = vmatpush1.msra.mxu0 0.0
  %695 = vmatprep.subr.mxu0 0.0
  %696 = vmatpush1.msra.mxu0 0.0
  %697 = vmatprep.subr.mxu0 0.0
  %698 = vmatpush1.msra.mxu0 0.0
  %699 = vmatprep.subr.mxu0 0.0
  %700 = vmatpush1.msra.mxu0 0.0
  %701 = vmatprep.subr.mxu0 0.0
  %702 = vmatpush1.msra.mxu0 0.0
  %703 = vmatprep.subr.mxu0 0.0
  %704 = vmatpush1.msra.mxu0 0.0
  %705 = vmatprep.subr.mxu0 0.0
  %706 = vmatpush1.msra.mxu0 0.0
  %707 = vmatprep.subr.mxu0 0.0
  %708 = vmatpush1.msra.mxu0 0.0
  %709 = vmatprep.subr.mxu0 0.0
  %710 = vmatpush1.msra.mxu0 0.0
  %711 = vmatprep.subr.mxu0 0.0
  %712 = vmatpush1.msra.mxu0 0.0
  %713 = vmatprep.subr.mxu0 0.0
  %714 = vmatpush1.msra.mxu0 0.0
  %715 = vmatprep.subr.mxu0 0.0
  %716 = vmatpush1.msra.mxu0 0.0
  %717 = vmatprep.subr.mxu0 0.0
  %718 = vmatpush1.msra.mxu0 0.0
  %719 = vmatprep.subr.mxu0 0.0
  %720 = vmatpush1.msra.mxu0 0.0
  %721 = vmatprep.subr.mxu0 0.0
  %722 = vmatpush1.msra.mxu0 0.0
  %723 = vmatprep.subr.mxu0 0.0
  %724 = vmatpush1.msra.mxu0 0.0
  %725 = vmatprep.subr.mxu0 0.0
  %726 = vmatpush1.msra.mxu0 0.0
  %727 = vmatprep.subr.mxu0 0.0
  %728 = vmatpush1.msra.mxu0 0.0
  %729 = vmatprep.subr.mxu0 0.0
  %730 = vmatpush1.msra.mxu0 0.0
  %731 = vmatprep.subr.mxu0 0.0
  %732 = vmatpush1.msra.mxu0 0.0
  %733 = vmatprep.subr.mxu0 0.0
  %734 = vmatpush1.msra.mxu0 0.0
  %735 = vmatprep.mubr.f32.mxu0 0.0
  %736 = vmatmul.mubr.f32.gmra.mrb[0].mxu0 %v317
  %v737 = vpop.f32.mrb[0].mxu0
  %v738 = vadd.f32 %v299, %v737
  %v739 = vpop.f32.mrb[0].mxu0
  %740 = vmatprep.mubr.f32.mxu0 0.0
  %741 = vmatmul.mubr.f32.gmra.mrb[0].mxu0 %v320
  %v742 = vpop.f32.mrb[0].mxu0
  %v743 = vadd.f32 %v300, %v742
  %v744 = vpop.f32.mrb[0].mxu0
  %745 = vmatprep.mubr.f32.mxu0 0.0
  %746 = vmatmul.mubr.f32.gmra.mrb[0].mxu0 %v323
  %v747 = vpop.f32.mrb[0].mxu0
  %v748 = vadd.f32 %v301, %v747
  %v749 = vpop.f32.mrb[0].mxu0
  %750 = vmatprep.mubr.f32.mxu0 0.0
  %751 = vmatmul.mubr.f32.gmra.mrb[0].mxu0 %v326
  %v752 = vpop.f32.mrb[0].mxu0
  %v753 = vadd.f32 %v302, %v752
  %v754 = vpop.f32.mrb[0].mxu0
  %755 = vmatprep.mubr.f32.mxu0 0.0
  %756 = vmatmul.mubr.f32.gmra.mrb[0].mxu0 %v329
  %v757 = vpop.f32.mrb[0].mxu0
  %v758 = vadd.f32 %v303, %v757
  %v759 = vpop.f32.mrb[0].mxu0
  %760 = vmatprep.mubr.f32.mxu0 0.0
  %761 = vmatmul.mubr.f32.gmra.mrb[0].mxu0 %v332
  %v762 = vpop.f32.mrb[0].mxu0
  %v763 = vadd.f32 %v304, %v762
  %v764 = vpop.f32.mrb[0].mxu0
  %765 = vmatprep.mubr.f32.mxu0 0.0
  %766 = vmatmul.mubr.f32.gmra.mrb[0].mxu0 %v335
  %v767 = vpop.f32.mrb[0].mxu0
  %v768 = vadd.f32 %v305, %v767
  %v769 = vpop.f32.mrb[0].mxu0
  %770 = vmatprep.mubr.f32.mxu0 0.0
  %771 = vmatmul.mubr.f32.gmra.mrb[0].mxu0 %v338
  %v772 = vpop.f32.mrb[0].mxu0
  %v773 = vadd.f32 %v306, %v772
  %v774 = vpop.f32.mrb[0].mxu0
  %775 = vdwg.mxu0
  %v776 = vld [vmem:[%s2 + $0x60] sm:$0xff]
  %v777 = vld [vmem:[%s2 + $0x68] sm:$0xff]
  %v778 = vld [vmem:[%s2 + $0x70] sm:$0xff]
  %v779 = vld [vmem:[%s2 + $0x78] sm:$0xff]
  %v781 = vsel %vm26, %v738, 0
  %v784 = vsel %vm26, %v743, 0
  %v787 = vsel %vm26, %v748, 0
  %v790 = vsel %vm26, %v753, 0
  %v793 = vsel %vm26, %v758, 0
  %v796 = vsel %vm26, %v763, 0
  %v799 = vsel %vm26, %v768, 0
  %v802 = vsel %vm26, %v773, 0
  %804 = vmatprep.subr.mxu0 0.0
  %805 = vmatpush1.msra.mxu0 %v776
  %806 = vmatprep.subr.mxu0 0.0
  %807 = vmatpush1.msra.mxu0 %v777
  %808 = vmatprep.subr.mxu0 0.0
  %809 = vmatpush1.msra.mxu0 %v778
  %810 = vmatprep.subr.mxu0 0.0
  %811 = vmatpush1.msra.mxu0 %v779
  %812 = vmatprep.subr.mxu0 0.0
  %813 = vmatpush1.msra.mxu0 0.0
  %814 = vmatprep.subr.mxu0 0.0
  %815 = vmatpush1.msra.mxu0 0.0
  %816 = vmatprep.subr.mxu0 0.0
  %817 = vmatpush1.msra.mxu0 0.0
  %818 = vmatprep.subr.mxu0 0.0
  %819 = vmatpush1.msra.mxu0 0.0
  %820 = vmatprep.subr.mxu0 0.0
  %821 = vmatpush1.msra.mxu0 0.0
  %822 = vmatprep.subr.mxu0 0.0
  %823 = vmatpush1.msra.mxu0 0.0
  %824 = vmatprep.subr.mxu0 0.0
  %825 = vmatpush1.msra.mxu0 0.0
  %826 = vmatprep.subr.mxu0 0.0
  %827 = vmatpush1.msra.mxu0 0.0
  %828 = vmatprep.subr.mxu0 0.0
  %829 = vmatpush1.msra.mxu0 0.0
  %830 = vmatprep.subr.mxu0 0.0
  %831 = vmatpush1.msra.mxu0 0.0
  %832 = vmatprep.subr.mxu0 0.0
  %833 = vmatpush1.msra.mxu0 0.0
  %834 = vmatprep.subr.mxu0 0.0
  %835 = vmatpush1.msra.mxu0 0.0
  %836 = vmatprep.subr.mxu0 0.0
  %837 = vmatpush1.msra.mxu0 0.0
  %838 = vmatprep.subr.mxu0 0.0
  %839 = vmatpush1.msra.mxu0 0.0
  %840 = vmatprep.subr.mxu0 0.0
  %841 = vmatpush1.msra.mxu0 0.0
  %842 = vmatprep.subr.mxu0 0.0
  %843 = vmatpush1.msra.mxu0 0.0
  %844 = vmatprep.subr.mxu0 0.0
  %845 = vmatpush1.msra.mxu0 0.0
  %846 = vmatprep.subr.mxu0 0.0
  %847 = vmatpush1.msra.mxu0 0.0
  %848 = vmatprep.subr.mxu0 0.0
  %849 = vmatpush1.msra.mxu0 0.0
  %850 = vmatprep.subr.mxu0 0.0
  %851 = vmatpush1.msra.mxu0 0.0
  %852 = vmatprep.subr.mxu0 0.0
  %853 = vmatpush1.msra.mxu0 0.0
  %854 = vmatprep.subr.mxu0 0.0
  %855 = vmatpush1.msra.mxu0 0.0
  %856 = vmatprep.subr.mxu0 0.0
  %857 = vmatpush1.msra.mxu0 0.0
  %858 = vmatprep.subr.mxu0 0.0
  %859 = vmatpush1.msra.mxu0 0.0
  %860 = vmatprep.subr.mxu0 0.0
  %861 = vmatpush1.msra.mxu0 0.0
  %862 = vmatprep.subr.mxu0 0.0
  %863 = vmatpush1.msra.mxu0 0.0
  %864 = vmatprep.subr.mxu0 0.0
  %865 = vmatpush1.msra.mxu0 0.0
  %866 = vmatprep.subr.mxu0 0.0
  %867 = vmatpush1.msra.mxu0 0.0
  %868 = vmatprep.mubr.f32.mxu0 0.0
  %869 = vmatmul.mubr.f32.gmra.mrb[0].mxu0 %v781
  %v870 = vpop.f32.mrb[0].mxu0
  %v871 = vadd.f32 0.0, %v870
  %v872 = vpop.f32.mrb[0].mxu0
  %873 = vmatprep.mubr.f32.mxu0 0.0
  %874 = vmatmul.mubr.f32.gmra.mrb[0].mxu0 %v784
  %v875 = vpop.f32.mrb[0].mxu0
  %v876 = vadd.f32 0.0, %v875
  %v877 = vpop.f32.mrb[0].mxu0
  %878 = vmatprep.mubr.f32.mxu0 0.0
  %879 = vmatmul.mubr.f32.gmra.mrb[0].mxu0 %v787
  %v880 = vpop.f32.mrb[0].mxu0
  %v881 = vadd.f32 0.0, %v880
  %v882 = vpop.f32.mrb[0].mxu0
  %883 = vmatprep.mubr.f32.mxu0 0.0
  %884 = vmatmul.mubr.f32.gmra.mrb[0].mxu0 %v790
  %v885 = vpop.f32.mrb[0].mxu0
  %v886 = vadd.f32 0.0, %v885
  %v887 = vpop.f32.mrb[0].mxu0
  %888 = vmatprep.mubr.f32.mxu0 0.0
  %889 = vmatmul.mubr.f32.gmra.mrb[0].mxu0 %v793
  %v890 = vpop.f32.mrb[0].mxu0
  %v891 = vadd.f32 0.0, %v890
  %v892 = vpop.f32.mrb[0].mxu0
  %893 = vmatprep.mubr.f32.mxu0 0.0
  %894 = vmatmul.mubr.f32.gmra.mrb[0].mxu0 %v796
  %v895 = vpop.f32.mrb[0].mxu0
  %v896 = vadd.f32 0.0, %v895
  %v897 = vpop.f32.mrb[0].mxu0
  %898 = vmatprep.mubr.f32.mxu0 0.0
  %899 = vmatmul.mubr.f32.gmra.mrb[0].mxu0 %v799
  %v900 = vpop.f32.mrb[0].mxu0
  %v901 = vadd.f32 0.0, %v900
  %v902 = vpop.f32.mrb[0].mxu0
  %903 = vmatprep.mubr.f32.mxu0 0.0
  %904 = vmatmul.mubr.f32.gmra.mrb[0].mxu0 %v802
  %v905 = vpop.f32.mrb[0].mxu0
  %v906 = vadd.f32 0.0, %v905
  %v907 = vpop.f32.mrb[0].mxu0
  %908 = vdwg.mxu0
  %v909 = vsel %vm26, %v871, 0.0
  %v910 = vsel %vm26, %v876, 0.0
  %v911 = vadd.f32 %v909, %v910
  %v912 = vsel %vm26, %v881, 0.0
  %v913 = vadd.f32 %v911, %v912
  %v914 = vsel %vm26, %v886, 0.0
  %v915 = vadd.f32 %v913, %v914
  %v916 = vsel %vm26, %v891, 0.0
  %v917 = vadd.f32 %v915, %v916
  %v918 = vsel %vm26, %v896, 0.0
  %v919 = vadd.f32 %v917, %v918
  %v920 = vsel %vm26, %v901, 0.0
  %v921 = vadd.f32 %v919, %v920
  %v922 = vsel %vm26, %v906, 0.0
  %v923 = vadd.f32 %v921, %v922
  %v924 = vrot.slane %v923, 4
  %v925 = vadd.f32 %v923, %v924
  %v926 = vrot.slane %v925, 2
  %v927 = vadd.f32 %v925, %v926
  %v928 = vrot.slane %v927, 1
  %v929 = vadd.f32 %v927, %v928
  %v930 = vmul.f32 %v929, 0.015625
  %v931 = vmul.f32 %v871, %v871
  %v932 = vmul.f32 %v876, %v876
  %v933 = vmul.f32 %v881, %v881
  %v934 = vmul.f32 %v886, %v886
  %v935 = vmul.f32 %v891, %v891
  %v936 = vmul.f32 %v896, %v896
  %v937 = vmul.f32 %v901, %v901
  %v938 = vmul.f32 %v906, %v906
  %v939 = vsel %vm26, %v931, 0.0
  %v940 = vsel %vm26, %v932, 0.0
  %v941 = vadd.f32 %v939, %v940
  %v942 = vsel %vm26, %v933, 0.0
  %v943 = vadd.f32 %v941, %v942
  %v944 = vsel %vm26, %v934, 0.0
  %v945 = vadd.f32 %v943, %v944
  %v946 = vsel %vm26, %v935, 0.0
  %v947 = vadd.f32 %v945, %v946
  %v948 = vsel %vm26, %v936, 0.0
  %v949 = vadd.f32 %v947, %v948
  %v950 = vsel %vm26, %v937, 0.0
  %v951 = vadd.f32 %v949, %v950
  %v952 = vsel %vm26, %v938, 0.0
  %v953 = vadd.f32 %v951, %v952
  %v954 = vrot.slane %v953, 4
  %v955 = vadd.f32 %v953, %v954
  %v956 = vrot.slane %v955, 2
  %v957 = vadd.f32 %v955, %v956
  %v958 = vrot.slane %v957, 1
  %v959 = vadd.f32 %v957, %v958
  %v960 = vmul.f32 %v959, 0.015625
  %v961 = vmul.f32 %v930, %v930
  %v962 = vsub.f32 %v960, %v961
  %v963 = vld [vmem:[%s2 + $0x29] sm:$0x1]
  %v964 = vld [vmem:[%s2 + $0x31] sm:$0x1]
  %v965 = vadd.f32 %v962, 1e-05
  %v966 = vrsqrt.pop %v965
  %v967 = vmul.f32 %v963, %v966
  %v968 = vlaneseq
  %v969 = vshrl.u32 %v968, 7
  %v970 = vsub.s32 0, %v969
  %v971 = vrot.slane %v967, %v970
  %v972 = vmul.f32 %v871, %v971
  %v973 = vmul.f32 %v876, %v971
  %v974 = vmul.f32 %v881, %v971
  %v975 = vmul.f32 %v886, %v971
  %v976 = vmul.f32 %v891, %v971
  %v977 = vmul.f32 %v896, %v971
  %v978 = vmul.f32 %v901, %v971
  %v979 = vmul.f32 %v906, %v971
  %v980 = vmul.f32 %v930, %v967
  %v981 = vsub.f32 %v964, %v980
  %v982 = vlaneseq
  %v983 = vshrl.u32 %v982, 7
  %v984 = vsub.s32 0, %v983
  %v985 = vrot.slane %v981, %v984
  %v986 = vadd.f32 %v972, %v985
  %v987 = vadd.f32 %v973, %v985
  %v988 = vadd.f32 %v974, %v985
  %v989 = vadd.f32 %v975, %v985
  %v990 = vadd.f32 %v976, %v985
  %v991 = vadd.f32 %v977, %v985
  %v992 = vadd.f32 %v978, %v985
  %v993 = vadd.f32 %v979, %v985
  %v994 = vmax.f32 %v986, 0.0
  %v995 = vmax.f32 %v987, 0.0
  %v996 = vmax.f32 %v988, 0.0
  %v997 = vmax.f32 %v989, 0.0
  %v998 = vmax.f32 %v990, 0.0
  %v999 = vmax.f32 %v991, 0.0
  %v1000 = vmax.f32 %v992, 0.0
  %v1001 = vmax.f32 %v993, 0.0
  %1002 = vmatprep.subr.mxu0 0.0
  %1003 = vmatpush1.msra.mxu0 %v994
  %1004 = vmatprep.subr.mxu0 0.0
  %1005 = vmatpush1.msra.mxu0 %v995
  %1006 = vmatprep.subr.mxu0 0.0
  %1007 = vmatpush1.msra.mxu0 %v996
  %1008 = vmatprep.subr.mxu0 0.0
  %1009 = vmatpush1.msra.mxu0 %v997
  %1010 = vmatprep.subr.mxu0 0.0
  %1011 = vmatpush1.msra.mxu0 %v998
  %1012 = vmatprep.subr.mxu0 0.0
  %1013 = vmatpush1.msra.mxu0 %v999
  %1014 = vmatprep.subr.mxu0 0.0
  %1015 = vmatpush1.msra.mxu0 %v1000
  %1016 = vmatprep.subr.mxu0 0.0
  %1017 = vmatpush1.msra.mxu0 %v1001
  %1018 = vmatprep.subr.mxu0 0.0
  %1019 = vmatpush1.msra.mxu0 0.0
  %1020 = vmatprep.subr.mxu0 0.0
  %1021 = vmatpush1.msra.mxu0 0.0
  %1022 = vmatprep.subr.mxu0 0.0
  %1023 = vmatpush1.msra.mxu0 0.0
  %1024 = vmatprep.subr.mxu0 0.0
  %1025 = vmatpush1.msra.mxu0 0.0
  %1026 = vmatprep.subr.mxu0 0.0
  %1027 = vmatpush1.msra.mxu0 0.0
  %1028 = vmatprep.subr.mxu0 0.0
  %1029 = vmatpush1.msra.mxu0 0.0
  %1030 = vmatprep.subr.mxu0 0.0
  %1031 = vmatpush1.msra.mxu0 0.0
  %1032 = vmatprep.subr.mxu0 0.0
  %1033 = vmatpush1.msra.mxu0 0.0
  %1034 = vmatprep.subr.mxu0 0.0
  %1035 = vmatpush1.msra.mxu0 0.0
  %1036 = vmatprep.subr.mxu0 0.0
  %1037 = vmatpush1.msra.mxu0 0.0
  %1038 = vmatprep.subr.mxu0 0.0
  %1039 = vmatpush1.msra.mxu0 0.0
  %1040 = vmatprep.subr.mxu0 0.0
  %1041 = vmatpush1.msra.mxu0 0.0
  %1042 = vmatprep.subr.mxu0 0.0
  %1043 = vmatpush1.msra.mxu0 0.0
  %1044 = vmatprep.subr.mxu0 0.0
  %1045 = vmatpush1.msra.mxu0 0.0
  %1046 = vmatprep.subr.mxu0 0.0
  %1047 = vmatpush1.msra.mxu0 0.0
  %1048 = vmatprep.subr.mxu0 0.0
  %1049 = vmatpush1.msra.mxu0 0.0
  %1050 = vmatprep.subr.mxu0 0.0
  %1051 = vmatpush1.msra.mxu0 0.0
  %1052 = vmatprep.subr.mxu0 0.0
  %1053 = vmatpush1.msra.mxu0 0.0
  %1054 = vmatprep.subr.mxu0 0.0
  %1055 = vmatpush1.msra.mxu0 0.0
  %1056 = vmatprep.subr.mxu0 0.0
  %1057 = vmatpush1.msra.mxu0 0.0
  %1058 = vmatprep.subr.mxu0 0.0
  %1059 = vmatpush1.msra.mxu0 0.0
  %1060 = vmatprep.subr.mxu0 0.0
  %1061 = vmatpush1.msra.mxu0 0.0
  %1062 = vmatprep.subr.mxu0 0.0
  %1063 = vmatpush1.msra.mxu0 0.0
  %1064 = vmatprep.subr.mxu0 0.0
  %1065 = vmatpush1.msra.mxu0 0.0
  %1066 = vmatprep.mubr.f32.mxu0 0.0
  %1067 = vmatmul.mubr.f32.gmra.mrb[0].mxu0 %v317
  %v1068 = vpop.f32.mrb[0].mxu0
  %v1069 = vadd.f32 %v299, %v1068
  %v1070 = vpop.f32.mrb[0].mxu0
  %1071 = vmatprep.mubr.f32.mxu0 0.0
  %1072 = vmatmul.mubr.f32.gmra.mrb[0].mxu0 %v320
  %v1073 = vpop.f32.mrb[0].mxu0
  %v1074 = vadd.f32 %v300, %v1073
  %v1075 = vpop.f32.mrb[0].mxu0
  %1076 = vmatprep.mubr.f32.mxu0 0.0
  %1077 = vmatmul.mubr.f32.gmra.mrb[0].mxu0 %v323
  %v1078 = vpop.f32.mrb[0].mxu0
  %v1079 = vadd.f32 %v301, %v1078
  %v1080 = vpop.f32.mrb[0].mxu0
  %1081 = vmatprep.mubr.f32.mxu0 0.0
  %1082 = vmatmul.mubr.f32.gmra.mrb[0].mxu0 %v326
  %v1083 = vpop.f32.mrb[0].mxu0
  %v1084 = vadd.f32 %v302, %v1083
  %v1085 = vpop.f32.mrb[0].mxu0
  %1086 = vmatprep.mubr.f32.mxu0 0.0
  %1087 = vmatmul.mubr.f32.gmra.mrb[0].mxu0 %v329
  %v1088 = vpop.f32.mrb[0].mxu0
  %v1089 = vadd.f32 %v303, %v1088
  %v1090 = vpop.f32.mrb[0].mxu0
  %1091 = vmatprep.mubr.f32.mxu0 0.0
  %1092 = vmatmul.mubr.f32.gmra.mrb[0].mxu0 %v332
  %v1093 = vpop.f32.mrb[0].mxu0
  %v1094 = vadd.f32 %v304, %v1093
  %v1095 = vpop.f32.mrb[0].mxu0
  %1096 = vmatprep.mubr.f32.mxu0 0.0
  %1097 = vmatmul.mubr.f32.gmra.mrb[0].mxu0 %v335
  %v1098 = vpop.f32.mrb[0].mxu0
  %v1099 = vadd.f32 %v305, %v1098
  %v1100 = vpop.f32.mrb[0].mxu0
  %1101 = vmatprep.mubr.f32.mxu0 0.0
  %1102 = vmatmul.mubr.f32.gmra.mrb[0].mxu0 %v338
  %v1103 = vpop.f32.mrb[0].mxu0
  %v1104 = vadd.f32 %v306, %v1103
  %v1105 = vpop.f32.mrb[0].mxu0
  %1106 = vdwg.mxu0
  %v1107 = vld [vmem:[%s2 + $0x80] sm:$0xff]
  %v1108 = vld [vmem:[%s2 + $0x88] sm:$0xff]
  %v1109 = vld [vmem:[%s2 + $0x90] sm:$0xff]
  %v1110 = vld [vmem:[%s2 + $0x98] sm:$0xff]
  %v1112 = vsel %vm26, %v1069, 0
  %v1115 = vsel %vm26, %v1074, 0
  %v1118 = vsel %vm26, %v1079, 0
  %v1121 = vsel %vm26, %v1084, 0
  %v1124 = vsel %vm26, %v1089, 0
  %v1127 = vsel %vm26, %v1094, 0
  %v1130 = vsel %vm26, %v1099, 0
  %v1133 = vsel %vm26, %v1104, 0
  %1135 = vmatprep.subr.mxu0 0.0
  %1136 = vmatpush1.msra.mxu0 %v1107
  %1137 = vmatprep.subr.mxu0 0.0
  %1138 = vmatpush1.msra.mxu0 %v1108
  %1139 = vmatprep.subr.mxu0 0.0
  %1140 = vmatpush1.msra.mxu0 %v1109
  %1141 = vmatprep.subr.mxu0 0.0
  %1142 = vmatpush1.msra.mxu0 %v1110
  %1143 = vmatprep.subr.mxu0 0.0
  %1144 = vmatpush1.msra.mxu0 0.0
  %1145 = vmatprep.subr.mxu0 0.0
  %1146 = vmatpush1.msra.mxu0 0.0
  %1147 = vmatprep.subr.mxu0 0.0
  %1148 = vmatpush1.msra.mxu0 0.0
  %1149 = vmatprep.subr.mxu0 0.0
  %1150 = vmatpush1.msra.mxu0 0.0
  %1151 = vmatprep.subr.mxu0 0.0
  %1152 = vmatpush1.msra.mxu0 0.0
  %1153 = vmatprep.subr.mxu0 0.0
  %1154 = vmatpush1.msra.mxu0 0.0
  %1155 = vmatprep.subr.mxu0 0.0
  %1156 = vmatpush1.msra.mxu0 0.0
  %1157 = vmatprep.subr.mxu0 0.0
  %1158 = vmatpush1.msra.mxu0 0.0
  %1159 = vmatprep.subr.mxu0 0.0
  %1160 = vmatpush1.msra.mxu0 0.0
  %1161 = vmatprep.subr.mxu0 0.0
  %1162 = vmatpush1.msra.mxu0 0.0
  %1163 = vmatprep.subr.mxu0 0.0
  %1164 = vmatpush1.msra.mxu0 0.0
  %1165 = vmatprep.subr.mxu0 0.0
  %1166 = vmatpush1.msra.mxu0 0.0
  %1167 = vmatprep.subr.mxu0 0.0
  %1168 = vmatpush1.msra.mxu0 0.0
  %1169 = vmatprep.subr.mxu0 0.0
  %1170 = vmatpush1.msra.mxu0 0.0
  %1171 = vmatprep.subr.mxu0 0.0
  %1172 = vmatpush1.msra.mxu0 0.0
  %1173 = vmatprep.subr.mxu0 0.0
  %1174 = vmatpush1.msra.mxu0 0.0
  %1175 = vmatprep.subr.mxu0 0.0
  %1176 = vmatpush1.msra.mxu0 0.0
  %1177 = vmatprep.subr.mxu0 0.0
  %1178 = vmatpush1.msra.mxu0 0.0
  %1179 = vmatprep.subr.mxu0 0.0
  %1180 = vmatpush1.msra.mxu0 0.0
  %1181 = vmatprep.subr.mxu0 0.0
  %1182 = vmatpush1.msra.mxu0 0.0
  %1183 = vmatprep.subr.mxu0 0.0
  %1184 = vmatpush1.msra.mxu0 0.0
  %1185 = vmatprep.subr.mxu0 0.0
  %1186 = vmatpush1.msra.mxu0 0.0
  %1187 = vmatprep.subr.mxu0 0.0
  %1188 = vmatpush1.msra.mxu0 0.0
  %1189 = vmatprep.subr.mxu0 0.0
  %1190 = vmatpush1.msra.mxu0 0.0
  %1191 = vmatprep.subr.mxu0 0.0
  %1192 = vmatpush1.msra.mxu0 0.0
  %1193 = vmatprep.subr.mxu0 0.0
  %1194 = vmatpush1.msra.mxu0 0.0
  %1195 = vmatprep.subr.mxu0 0.0
  %1196 = vmatpush1.msra.mxu0 0.0
  %1197 = vmatprep.subr.mxu0 0.0
  %1198 = vmatpush1.msra.mxu0 0.0
  %1199 = vmatprep.mubr.f32.mxu0 0.0
  %1200 = vmatmul.mubr.f32.gmra.mrb[0].mxu0 %v1112
  %v1201 = vpop.f32.mrb[0].mxu0
  %v1202 = vadd.f32 0.0, %v1201
  %v1203 = vpop.f32.mrb[0].mxu0
  %1204 = vmatprep.mubr.f32.mxu0 0.0
  %1205 = vmatmul.mubr.f32.gmra.mrb[0].mxu0 %v1115
  %v1206 = vpop.f32.mrb[0].mxu0
  %v1207 = vadd.f32 0.0, %v1206
  %v1208 = vpop.f32.mrb[0].mxu0
  %1209 = vmatprep.mubr.f32.mxu0 0.0
  %1210 = vmatmul.mubr.f32.gmra.mrb[0].mxu0 %v1118
  %v1211 = vpop.f32.mrb[0].mxu0
  %v1212 = vadd.f32 0.0, %v1211
  %v1213 = vpop.f32.mrb[0].mxu0
  %1214 = vmatprep.mubr.f32.mxu0 0.0
  %1215 = vmatmul.mubr.f32.gmra.mrb[0].mxu0 %v1121
  %v1216 = vpop.f32.mrb[0].mxu0
  %v1217 = vadd.f32 0.0, %v1216
  %v1218 = vpop.f32.mrb[0].mxu0
  %1219 = vmatprep.mubr.f32.mxu0 0.0
  %1220 = vmatmul.mubr.f32.gmra.mrb[0].mxu0 %v1124
  %v1221 = vpop.f32.mrb[0].mxu0
  %v1222 = vadd.f32 0.0, %v1221
  %v1223 = vpop.f32.mrb[0].mxu0
  %1224 = vmatprep.mubr.f32.mxu0 0.0
  %1225 = vmatmul.mubr.f32.gmra.mrb[0].mxu0 %v1127
  %v1226 = vpop.f32.mrb[0].mxu0
  %v1227 = vadd.f32 0.0, %v1226
  %v1228 = vpop.f32.mrb[0].mxu0
  %1229 = vmatprep.mubr.f32.mxu0 0.0
  %1230 = vmatmul.mubr.f32.gmra.mrb[0].mxu0 %v1130
  %v1231 = vpop.f32.mrb[0].mxu0
  %v1232 = vadd.f32 0.0, %v1231
  %v1233 = vpop.f32.mrb[0].mxu0
  %1234 = vmatprep.mubr.f32.mxu0 0.0
  %1235 = vmatmul.mubr.f32.gmra.mrb[0].mxu0 %v1133
  %v1236 = vpop.f32.mrb[0].mxu0
  %v1237 = vadd.f32 0.0, %v1236
  %v1238 = vpop.f32.mrb[0].mxu0
  %1239 = vdwg.mxu0
  %v1240 = vsel %vm26, %v1202, 0.0
  %v1241 = vsel %vm26, %v1207, 0.0
  %v1242 = vadd.f32 %v1240, %v1241
  %v1243 = vsel %vm26, %v1212, 0.0
  %v1244 = vadd.f32 %v1242, %v1243
  %v1245 = vsel %vm26, %v1217, 0.0
  %v1246 = vadd.f32 %v1244, %v1245
  %v1247 = vsel %vm26, %v1222, 0.0
  %v1248 = vadd.f32 %v1246, %v1247
  %v1249 = vsel %vm26, %v1227, 0.0
  %v1250 = vadd.f32 %v1248, %v1249
  %v1251 = vsel %vm26, %v1232, 0.0
  %v1252 = vadd.f32 %v1250, %v1251
  %v1253 = vsel %vm26, %v1237, 0.0
  %v1254 = vadd.f32 %v1252, %v1253
  %v1255 = vrot.slane %v1254, 4
  %v1256 = vadd.f32 %v1254, %v1255
  %v1257 = vrot.slane %v1256, 2
  %v1258 = vadd.f32 %v1256, %v1257
  %v1259 = vrot.slane %v1258, 1
  %v1260 = vadd.f32 %v1258, %v1259
  %v1261 = vmul.f32 %v1260, 0.015625
  %v1262 = vmul.f32 %v1202, %v1202
  %v1263 = vmul.f32 %v1207, %v1207
  %v1264 = vmul.f32 %v1212, %v1212
  %v1265 = vmul.f32 %v1217, %v1217
  %v1266 = vmul.f32 %v1222, %v1222
  %v1267 = vmul.f32 %v1227, %v1227
  %v1268 = vmul.f32 %v1232, %v1232
  %v1269 = vmul.f32 %v1237, %v1237
  %v1270 = vsel %vm26, %v1262, 0.0
  %v1271 = vsel %vm26, %v1263, 0.0
  %v1272 = vadd.f32 %v1270, %v1271
  %v1273 = vsel %vm26, %v1264, 0.0
  %v1274 = vadd.f32 %v1272, %v1273
  %v1275 = vsel %vm26, %v1265, 0.0
  %v1276 = vadd.f32 %v1274, %v1275
  %v1277 = vsel %vm26, %v1266, 0.0
  %v1278 = vadd.f32 %v1276, %v1277
  %v1279 = vsel %vm26, %v1267, 0.0
  %v1280 = vadd.f32 %v1278, %v1279
  %v1281 = vsel %vm26, %v1268, 0.0
  %v1282 = vadd.f32 %v1280, %v1281
  %v1283 = vsel %vm26, %v1269, 0.0
  %v1284 = vadd.f32 %v1282, %v1283
  %v1285 = vrot.slane %v1284, 4
  %v1286 = vadd.f32 %v1284, %v1285
  %v1287 = vrot.slane %v1286, 2
  %v1288 = vadd.f32 %v1286, %v1287
  %v1289 = vrot.slane %v1288, 1
  %v1290 = vadd.f32 %v1288, %v1289
  %v1291 = vmul.f32 %v1290, 0.015625
  %v1292 = vmul.f32 %v1261, %v1261
  %v1293 = vsub.f32 %v1291, %v1292
  %v1294 = vld [vmem:[%s2 + $0x2a] sm:$0x1]
  %v1295 = vld [vmem:[%s2 + $0x32] sm:$0x1]
  %v1296 = vadd.f32 %v1293, 1e-05
  %v1297 = vrsqrt.pop %v1296
  %v1298 = vmul.f32 %v1294, %v1297
  %v1299 = vlaneseq
  %v1300 = vshrl.u32 %v1299, 7
  %v1301 = vsub.s32 0, %v1300
  %v1302 = vrot.slane %v1298, %v1301
  %v1303 = vmul.f32 %v1202, %v1302
  %v1304 = vmul.f32 %v1207, %v1302
  %v1305 = vmul.f32 %v1212, %v1302
  %v1306 = vmul.f32 %v1217, %v1302
  %v1307 = vmul.f32 %v1222, %v1302
  %v1308 = vmul.f32 %v1227, %v1302
  %v1309 = vmul.f32 %v1232, %v1302
  %v1310 = vmul.f32 %v1237, %v1302
  %v1311 = vmul.f32 %v1261, %v1298
  %v1312 = vsub.f32 %v1295, %v1311
  %v1313 = vlaneseq
  %v1314 = vshrl.u32 %v1313, 7
  %v1315 = vsub.s32 0, %v1314
  %v1316 = vrot.slane %v1312, %v1315
  %v1317 = vadd.f32 %v1303, %v1316
  %v1318 = vadd.f32 %v1304, %v1316
  %v1319 = vadd.f32 %v1305, %v1316
  %v1320 = vadd.f32 %v1306, %v1316
  %v1321 = vadd.f32 %v1307, %v1316
  %v1322 = vadd.f32 %v1308, %v1316
  %v1323 = vadd.f32 %v1309, %v1316
  %v1324 = vadd.f32 %v1310, %v1316
  %v1325 = vmax.f32 %v1317, 0.0
  %v1326 = vmax.f32 %v1318, 0.0
  %v1327 = vmax.f32 %v1319, 0.0
  %v1328 = vmax.f32 %v1320, 0.0
  %v1329 = vmax.f32 %v1321, 0.0
  %v1330 = vmax.f32 %v1322, 0.0
  %v1331 = vmax.f32 %v1323, 0.0
  %v1332 = vmax.f32 %v1324, 0.0
  %1333 = vmatprep.subr.mxu0 0.0
  %1334 = vmatpush1.msra.mxu0 %v1325
  %1335 = vmatprep.subr.mxu0 0.0
  %1336 = vmatpush1.msra.mxu0 %v1326
  %1337 = vmatprep.subr.mxu0 0.0
  %1338 = vmatpush1.msra.mxu0 %v1327
  %1339 = vmatprep.subr.mxu0 0.0
  %1340 = vmatpush1.msra.mxu0 %v1328
  %1341 = vmatprep.subr.mxu0 0.0
  %1342 = vmatpush1.msra.mxu0 %v1329
  %1343 = vmatprep.subr.mxu0 0.0
  %1344 = vmatpush1.msra.mxu0 %v1330
  %1345 = vmatprep.subr.mxu0 0.0
  %1346 = vmatpush1.msra.mxu0 %v1331
  %1347 = vmatprep.subr.mxu0 0.0
  %1348 = vmatpush1.msra.mxu0 %v1332
  %1349 = vmatprep.subr.mxu0 0.0
  %1350 = vmatpush1.msra.mxu0 0.0
  %1351 = vmatprep.subr.mxu0 0.0
  %1352 = vmatpush1.msra.mxu0 0.0
  %1353 = vmatprep.subr.mxu0 0.0
  %1354 = vmatpush1.msra.mxu0 0.0
  %1355 = vmatprep.subr.mxu0 0.0
  %1356 = vmatpush1.msra.mxu0 0.0
  %1357 = vmatprep.subr.mxu0 0.0
  %1358 = vmatpush1.msra.mxu0 0.0
  %1359 = vmatprep.subr.mxu0 0.0
  %1360 = vmatpush1.msra.mxu0 0.0
  %1361 = vmatprep.subr.mxu0 0.0
  %1362 = vmatpush1.msra.mxu0 0.0
  %1363 = vmatprep.subr.mxu0 0.0
  %1364 = vmatpush1.msra.mxu0 0.0
  %1365 = vmatprep.subr.mxu0 0.0
  %1366 = vmatpush1.msra.mxu0 0.0
  %1367 = vmatprep.subr.mxu0 0.0
  %1368 = vmatpush1.msra.mxu0 0.0
  %1369 = vmatprep.subr.mxu0 0.0
  %1370 = vmatpush1.msra.mxu0 0.0
  %1371 = vmatprep.subr.mxu0 0.0
  %1372 = vmatpush1.msra.mxu0 0.0
  %1373 = vmatprep.subr.mxu0 0.0
  %1374 = vmatpush1.msra.mxu0 0.0
  %1375 = vmatprep.subr.mxu0 0.0
  %1376 = vmatpush1.msra.mxu0 0.0
  %1377 = vmatprep.subr.mxu0 0.0
  %1378 = vmatpush1.msra.mxu0 0.0
  %1379 = vmatprep.subr.mxu0 0.0
  %1380 = vmatpush1.msra.mxu0 0.0
  %1381 = vmatprep.subr.mxu0 0.0
  %1382 = vmatpush1.msra.mxu0 0.0
  %1383 = vmatprep.subr.mxu0 0.0
  %1384 = vmatpush1.msra.mxu0 0.0
  %1385 = vmatprep.subr.mxu0 0.0
  %1386 = vmatpush1.msra.mxu0 0.0
  %1387 = vmatprep.subr.mxu0 0.0
  %1388 = vmatpush1.msra.mxu0 0.0
  %1389 = vmatprep.subr.mxu0 0.0
  %1390 = vmatpush1.msra.mxu0 0.0
  %1391 = vmatprep.subr.mxu0 0.0
  %1392 = vmatpush1.msra.mxu0 0.0
  %1393 = vmatprep.subr.mxu0 0.0
  %1394 = vmatpush1.msra.mxu0 0.0
  %1395 = vmatprep.subr.mxu0 0.0
  %1396 = vmatpush1.msra.mxu0 0.0
  %1397 = vmatprep.mubr.f32.mxu0 0.0
  %1398 = vmatmul.mubr.f32.gmra.mrb[0].mxu0 %v317
  %v1399 = vpop.f32.mrb[0].mxu0
  %v1400 = vadd.f32 %v299, %v1399
  %v1401 = vpop.f32.mrb[0].mxu0
  %1402 = vmatprep.mubr.f32.mxu0 0.0
  %1403 = vmatmul.mubr.f32.gmra.mrb[0].mxu0 %v320
  %v1404 = vpop.f32.mrb[0].mxu0
  %v1405 = vadd.f32 %v300, %v1404
  %v1406 = vpop.f32.mrb[0].mxu0
  %1407 = vmatprep.mubr.f32.mxu0 0.0
  %1408 = vmatmul.mubr.f32.gmra.mrb[0].mxu0 %v323
  %v1409 = vpop.f32.mrb[0].mxu0
  %v1410 = vadd.f32 %v301, %v1409
  %v1411 = vpop.f32.mrb[0].mxu0
  %1412 = vmatprep.mubr.f32.mxu0 0.0
  %1413 = vmatmul.mubr.f32.gmra.mrb[0].mxu0 %v326
  %v1414 = vpop.f32.mrb[0].mxu0
  %v1415 = vadd.f32 %v302, %v1414
  %v1416 = vpop.f32.mrb[0].mxu0
  %1417 = vmatprep.mubr.f32.mxu0 0.0
  %1418 = vmatmul.mubr.f32.gmra.mrb[0].mxu0 %v329
  %v1419 = vpop.f32.mrb[0].mxu0
  %v1420 = vadd.f32 %v303, %v1419
  %v1421 = vpop.f32.mrb[0].mxu0
  %1422 = vmatprep.mubr.f32.mxu0 0.0
  %1423 = vmatmul.mubr.f32.gmra.mrb[0].mxu0 %v332
  %v1424 = vpop.f32.mrb[0].mxu0
  %v1425 = vadd.f32 %v304, %v1424
  %v1426 = vpop.f32.mrb[0].mxu0
  %1427 = vmatprep.mubr.f32.mxu0 0.0
  %1428 = vmatmul.mubr.f32.gmra.mrb[0].mxu0 %v335
  %v1429 = vpop.f32.mrb[0].mxu0
  %v1430 = vadd.f32 %v305, %v1429
  %v1431 = vpop.f32.mrb[0].mxu0
  %1432 = vmatprep.mubr.f32.mxu0 0.0
  %1433 = vmatmul.mubr.f32.gmra.mrb[0].mxu0 %v338
  %v1434 = vpop.f32.mrb[0].mxu0
  %v1435 = vadd.f32 %v306, %v1434
  %v1436 = vpop.f32.mrb[0].mxu0
  %1437 = vdwg.mxu0
  %v1438 = vld [vmem:[%s2 + $0xa0] sm:$0xff]
  %v1439 = vld [vmem:[%s2 + $0xa8] sm:$0xff]
  %v1440 = vld [vmem:[%s2 + $0xb0] sm:$0xff]
  %v1441 = vld [vmem:[%s2 + $0xb8] sm:$0xff]
  %v1443 = vsel %vm26, %v1400, 0
  %v1446 = vsel %vm26, %v1405, 0
  %v1449 = vsel %vm26, %v1410, 0
  %v1452 = vsel %vm26, %v1415, 0
  %v1455 = vsel %vm26, %v1420, 0
  %v1458 = vsel %vm26, %v1425, 0
  %v1461 = vsel %vm26, %v1430, 0
  %v1464 = vsel %vm26, %v1435, 0
  %1466 = vmatprep.subr.mxu0 0.0
  %1467 = vmatpush1.msra.mxu0 %v1438
  %1468 = vmatprep.subr.mxu0 0.0
  %1469 = vmatpush1.msra.mxu0 %v1439
  %1470 = vmatprep.subr.mxu0 0.0
  %1471 = vmatpush1.msra.mxu0 %v1440
  %1472 = vmatprep.subr.mxu0 0.0
  %1473 = vmatpush1.msra.mxu0 %v1441
  %1474 = vmatprep.subr.mxu0 0.0
  %1475 = vmatpush1.msra.mxu0 0.0
  %1476 = vmatprep.subr.mxu0 0.0
  %1477 = vmatpush1.msra.mxu0 0.0
  %1478 = vmatprep.subr.mxu0 0.0
  %1479 = vmatpush1.msra.mxu0 0.0
  %1480 = vmatprep.subr.mxu0 0.0
  %1481 = vmatpush1.msra.mxu0 0.0
  %1482 = vmatprep.subr.mxu0 0.0
  %1483 = vmatpush1.msra.mxu0 0.0
  %1484 = vmatprep.subr.mxu0 0.0
  %1485 = vmatpush1.msra.mxu0 0.0
  %1486 = vmatprep.subr.mxu0 0.0
  %1487 = vmatpush1.msra.mxu0 0.0
  %1488 = vmatprep.subr.mxu0 0.0
  %1489 = vmatpush1.msra.mxu0 0.0
  %1490 = vmatprep.subr.mxu0 0.0
  %1491 = vmatpush1.msra.mxu0 0.0
  %1492 = vmatprep.subr.mxu0 0.0
  %1493 = vmatpush1.msra.mxu0 0.0
  %1494 = vmatprep.subr.mxu0 0.0
  %1495 = vmatpush1.msra.mxu0 0.0
  %1496 = vmatprep.subr.mxu0 0.0
  %1497 = vmatpush1.msra.mxu0 0.0
  %1498 = vmatprep.subr.mxu0 0.0
  %1499 = vmatpush1.msra.mxu0 0.0
  %1500 = vmatprep.subr.mxu0 0.0
  %1501 = vmatpush1.msra.mxu0 0.0
  %1502 = vmatprep.subr.mxu0 0.0
  %1503 = vmatpush1.msra.mxu0 0.0
  %1504 = vmatprep.subr.mxu0 0.0
  %1505 = vmatpush1.msra.mxu0 0.0
  %1506 = vmatprep.subr.mxu0 0.0
  %1507 = vmatpush1.msra.mxu0 0.0
  %1508 = vmatprep.subr.mxu0 0.0
  %1509 = vmatpush1.msra.mxu0 0.0
  %1510 = vmatprep.subr.mxu0 0.0
  %1511 = vmatpush1.msra.mxu0 0.0
  %1512 = vmatprep.subr.mxu0 0.0
  %1513 = vmatpush1.msra.mxu0 0.0
  %1514 = vmatprep.subr.mxu0 0.0
  %1515 = vmatpush1.msra.mxu0 0.0
  %1516 = vmatprep.subr.mxu0 0.0
  %1517 = vmatpush1.msra.mxu0 0.0
  %1518 = vmatprep.subr.mxu0 0.0
  %1519 = vmatpush1.msra.mxu0 0.0
  %1520 = vmatprep.subr.mxu0 0.0
  %1521 = vmatpush1.msra.mxu0 0.0
  %1522 = vmatprep.subr.mxu0 0.0
  %1523 = vmatpush1.msra.mxu0 0.0
  %1524 = vmatprep.subr.mxu0 0.0
  %1525 = vmatpush1.msra.mxu0 0.0
  %1526 = vmatprep.subr.mxu0 0.0
  %1527 = vmatpush1.msra.mxu0 0.0
  %1528 = vmatprep.subr.mxu0 0.0
  %1529 = vmatpush1.msra.mxu0 0.0
  %1530 = vmatprep.mubr.f32.mxu0 0.0
  %1531 = vmatmul.mubr.f32.gmra.mrb[0].mxu0 %v1443
  %v1532 = vpop.f32.mrb[0].mxu0
  %v1533 = vadd.f32 0.0, %v1532
  %v1534 = vpop.f32.mrb[0].mxu0
  %1535 = vmatprep.mubr.f32.mxu0 0.0
  %1536 = vmatmul.mubr.f32.gmra.mrb[0].mxu0 %v1446
  %v1537 = vpop.f32.mrb[0].mxu0
  %v1538 = vadd.f32 0.0, %v1537
  %v1539 = vpop.f32.mrb[0].mxu0
  %1540 = vmatprep.mubr.f32.mxu0 0.0
  %1541 = vmatmul.mubr.f32.gmra.mrb[0].mxu0 %v1449
  %v1542 = vpop.f32.mrb[0].mxu0
  %v1543 = vadd.f32 0.0, %v1542
  %v1544 = vpop.f32.mrb[0].mxu0
  %1545 = vmatprep.mubr.f32.mxu0 0.0
  %1546 = vmatmul.mubr.f32.gmra.mrb[0].mxu0 %v1452
  %v1547 = vpop.f32.mrb[0].mxu0
  %v1548 = vadd.f32 0.0, %v1547
  %v1549 = vpop.f32.mrb[0].mxu0
  %1550 = vmatprep.mubr.f32.mxu0 0.0
  %1551 = vmatmul.mubr.f32.gmra.mrb[0].mxu0 %v1455
  %v1552 = vpop.f32.mrb[0].mxu0
  %v1553 = vadd.f32 0.0, %v1552
  %v1554 = vpop.f32.mrb[0].mxu0
  %1555 = vmatprep.mubr.f32.mxu0 0.0
  %1556 = vmatmul.mubr.f32.gmra.mrb[0].mxu0 %v1458
  %v1557 = vpop.f32.mrb[0].mxu0
  %v1558 = vadd.f32 0.0, %v1557
  %v1559 = vpop.f32.mrb[0].mxu0
  %1560 = vmatprep.mubr.f32.mxu0 0.0
  %1561 = vmatmul.mubr.f32.gmra.mrb[0].mxu0 %v1461
  %v1562 = vpop.f32.mrb[0].mxu0
  %v1563 = vadd.f32 0.0, %v1562
  %v1564 = vpop.f32.mrb[0].mxu0
  %1565 = vmatprep.mubr.f32.mxu0 0.0
  %1566 = vmatmul.mubr.f32.gmra.mrb[0].mxu0 %v1464
  %v1567 = vpop.f32.mrb[0].mxu0
  %v1568 = vadd.f32 0.0, %v1567
  %v1569 = vpop.f32.mrb[0].mxu0
  %1570 = vdwg.mxu0
  %1579 = vrot.lane.b32.xlu0 %v871, 32
  %v1580 = vpop.permute.xlu0 %1579
  %1581 = vrot.lane.b32.xlu0 %v876, 32
  %v1582 = vpop.permute.xlu0 %1581
  %1583 = vrot.lane.b32.xlu0 %v881, 32
  %v1584 = vpop.permute.xlu0 %1583
  %1585 = vrot.lane.b32.xlu0 %v886, 32
  %v1586 = vpop.permute.xlu0 %1585
  %1587 = vrot.lane.b32.xlu0 %v891, 32
  %v1588 = vpop.permute.xlu0 %1587
  %1589 = vrot.lane.b32.xlu0 %v896, 32
  %v1590 = vpop.permute.xlu0 %1589
  %1591 = vrot.lane.b32.xlu0 %v901, 32
  %v1592 = vpop.permute.xlu0 %1591
  %1593 = vrot.lane.b32.xlu0 %v906, 32
  %v1594 = vpop.permute.xlu0 %1593
  %1611 = vrot.lane.b32.xlu0 %v1202, 64
  %v1612 = vpop.permute.xlu0 %1611
  %1613 = vrot.lane.b32.xlu0 %v1207, 64
  %v1614 = vpop.permute.xlu0 %1613
  %1615 = vrot.lane.b32.xlu0 %v1212, 64
  %v1616 = vpop.permute.xlu0 %1615
  %1617 = vrot.lane.b32.xlu0 %v1217, 64
  %v1618 = vpop.permute.xlu0 %1617
  %1619 = vrot.lane.b32.xlu0 %v1222, 64
  %v1620 = vpop.permute.xlu0 %1619
  %1621 = vrot.lane.b32.xlu0 %v1227, 64
  %v1622 = vpop.permute.xlu0 %1621
  %1623 = vrot.lane.b32.xlu0 %v1232, 64
  %v1624 = vpop.permute.xlu0 %1623
  %1625 = vrot.lane.b32.xlu0 %v1237, 64
  %v1626 = vpop.permute.xlu0 %1625
  %1643 = vrot.lane.b32.xlu0 %v1533, 96
  %v1644 = vpop.permute.xlu0 %1643
  %1645 = vrot.lane.b32.xlu0 %v1538, 96
  %v1646 = vpop.permute.xlu0 %1645
  %1647 = vrot.lane.b32.xlu0 %v1543, 96
  %v1648 = vpop.permute.xlu0 %1647
  %1649 = vrot.lane.b32.xlu0 %v1548, 96
  %v1650 = vpop.permute.xlu0 %1649
  %1651 = vrot.lane.b32.xlu0 %v1553, 96
  %v1652 = vpop.permute.xlu0 %1651
  %1653 = vrot.lane.b32.xlu0 %v1558, 96
  %v1654 = vpop.permute.xlu0 %1653
  %1655 = vrot.lane.b32.xlu0 %v1563, 96
  %v1656 = vpop.permute.xlu0 %1655
  %1657 = vrot.lane.b32.xlu0 %v1568, 96
  %v1658 = vpop.permute.xlu0 %1657
  %v1667 = vsel %vm26, %v540, %v1580
  %v1668 = vsel %vm26, %v545, %v1582
  %v1669 = vsel %vm26, %v550, %v1584
  %v1670 = vsel %vm26, %v555, %v1586
  %v1671 = vsel %vm26, %v560, %v1588
  %v1672 = vsel %vm26, %v565, %v1590
  %v1673 = vsel %vm26, %v570, %v1592
  %v1674 = vsel %vm26, %v575, %v1594
  %v1675 = vsel %vm169, %v1667, %v1612
  %v1676 = vsel %vm169, %v1668, %v1614
  %v1677 = vsel %vm169, %v1669, %v1616
  %v1678 = vsel %vm169, %v1670, %v1618
  %v1679 = vsel %vm169, %v1671, %v1620
  %v1680 = vsel %vm169, %v1672, %v1622
  %v1681 = vsel %vm169, %v1673, %v1624
  %v1682 = vsel %vm169, %v1674, %v1626
  %vm1683 = vcmask 785408
  %v1684 = vsel %vm1683, %v1675, %v1644
  %v1685 = vsel %vm1683, %v1676, %v1646
  %v1686 = vsel %vm1683, %v1677, %v1648
  %v1687 = vsel %vm1683, %v1678, %v1650
  %v1688 = vsel %vm1683, %v1679, %v1652
  %v1689 = vsel %vm1683, %v1680, %v1654
  %v1690 = vsel %vm1683, %v1681, %v1656
  %v1691 = vsel %vm1683, %v1682, %v1658
  %v1692 = vld [vmem:[%s2 + $0xc0] sm:$0xff]
  %v1693 = vld [vmem:[%s2 + $0xc8] sm:$0xff]
  %v1694 = vld [vmem:[%s2 + $0xd0] sm:$0xff]
  %v1695 = vld [vmem:[%s2 + $0xd8] sm:$0xff]
  %v1696 = vld [vmem:[%s2 + $0xe0] sm:$0xff]
  %v1697 = vld [vmem:[%s2 + $0xe8] sm:$0xff]
  %v1698 = vld [vmem:[%s2 + $0xf0] sm:$0xff]
  %v1699 = vld [vmem:[%s2 + $0xf8] sm:$0xff]
  %v1700 = vld [vmem:[%s2 + $0x100] sm:$0xff]
  %v1701 = vld [vmem:[%s2 + $0x108] sm:$0xff]
  %v1702 = vld [vmem:[%s2 + $0x110] sm:$0xff]
  %v1703 = vld [vmem:[%s2 + $0x118] sm:$0xff]
  %v1704 = vld [vmem:[%s2 + $0x120] sm:$0xff]
  %v1705 = vld [vmem:[%s2 + $0x128] sm:$0xff]
  %v1706 = vld [vmem:[%s2 + $0x130] sm:$0xff]
  %v1707 = vld [vmem:[%s2 + $0x138] sm:$0xff]
  %v1708 = vld [vmem:[%s2 + $0x38] sm:$0x1]
  %v1709 = vlaneseq
  %v1710 = vshrl.u32 %v1709, 7
  %v1711 = vsub.s32 0, %v1710
  %v1712 = vrot.slane %v1708, %v1711
  %1713 = vmatprep.subr.mxu0 0.0
  %1714 = vmatpush1.msra.mxu0 %v1692
  %1715 = vmatprep.subr.mxu0 0.0
  %1716 = vmatpush1.msra.mxu0 %v1693
  %1717 = vmatprep.subr.mxu0 0.0
  %1718 = vmatpush1.msra.mxu0 %v1694
  %1719 = vmatprep.subr.mxu0 0.0
  %1720 = vmatpush1.msra.mxu0 %v1695
  %1721 = vmatprep.subr.mxu0 0.0
  %1722 = vmatpush1.msra.mxu0 %v1696
  %1723 = vmatprep.subr.mxu0 0.0
  %1724 = vmatpush1.msra.mxu0 %v1697
  %1725 = vmatprep.subr.mxu0 0.0
  %1726 = vmatpush1.msra.mxu0 %v1698
  %1727 = vmatprep.subr.mxu0 0.0
  %1728 = vmatpush1.msra.mxu0 %v1699
  %1729 = vmatprep.subr.mxu0 0.0
  %1730 = vmatpush1.msra.mxu0 %v1700
  %1731 = vmatprep.subr.mxu0 0.0
  %1732 = vmatpush1.msra.mxu0 %v1701
  %1733 = vmatprep.subr.mxu0 0.0
  %1734 = vmatpush1.msra.mxu0 %v1702
  %1735 = vmatprep.subr.mxu0 0.0
  %1736 = vmatpush1.msra.mxu0 %v1703
  %1737 = vmatprep.subr.mxu0 0.0
  %1738 = vmatpush1.msra.mxu0 %v1704
  %1739 = vmatprep.subr.mxu0 0.0
  %1740 = vmatpush1.msra.mxu0 %v1705
  %1741 = vmatprep.subr.mxu0 0.0
  %1742 = vmatpush1.msra.mxu0 %v1706
  %1743 = vmatprep.subr.mxu0 0.0
  %1744 = vmatpush1.msra.mxu0 %v1707
  %1745 = vmatprep.subr.mxu0 0.0
  %1746 = vmatpush1.msra.mxu0 0.0
  %1747 = vmatprep.subr.mxu0 0.0
  %1748 = vmatpush1.msra.mxu0 0.0
  %1749 = vmatprep.subr.mxu0 0.0
  %1750 = vmatpush1.msra.mxu0 0.0
  %1751 = vmatprep.subr.mxu0 0.0
  %1752 = vmatpush1.msra.mxu0 0.0
  %1753 = vmatprep.subr.mxu0 0.0
  %1754 = vmatpush1.msra.mxu0 0.0
  %1755 = vmatprep.subr.mxu0 0.0
  %1756 = vmatpush1.msra.mxu0 0.0
  %1757 = vmatprep.subr.mxu0 0.0
  %1758 = vmatpush1.msra.mxu0 0.0
  %1759 = vmatprep.subr.mxu0 0.0
  %1760 = vmatpush1.msra.mxu0 0.0
  %1761 = vmatprep.subr.mxu0 0.0
  %1762 = vmatpush1.msra.mxu0 0.0
  %1763 = vmatprep.subr.mxu0 0.0
  %1764 = vmatpush1.msra.mxu0 0.0
  %1765 = vmatprep.subr.mxu0 0.0
  %1766 = vmatpush1.msra.mxu0 0.0
  %1767 = vmatprep.subr.mxu0 0.0
  %1768 = vmatpush1.msra.mxu0 0.0
  %1769 = vmatprep.subr.mxu0 0.0
  %1770 = vmatpush1.msra.mxu0 0.0
  %1771 = vmatprep.subr.mxu0 0.0
  %1772 = vmatpush1.msra.mxu0 0.0
  %1773 = vmatprep.subr.mxu0 0.0
  %1774 = vmatpush1.msra.mxu0 0.0
  %1775 = vmatprep.subr.mxu0 0.0
  %1776 = vmatpush1.msra.mxu0 0.0
  %1777 = vmatprep.mubr.f32.mxu0 0.0
  %1778 = vmatmul.mubr.f32.gmra.mrb[0].mxu0 %v1684
  %v1779 = vpop.f32.mrb[0].mxu0
  %v1780 = vadd.f32 %v1712, %v1779
  %v1781 = vpop.f32.mrb[0].mxu0
  %1782 = vmatprep.mubr.f32.mxu0 0.0
  %1783 = vmatmul.mubr.f32.gmra.mrb[0].mxu0 %v1685
  %v1784 = vpop.f32.mrb[0].mxu0
  %v1785 = vadd.f32 %v1712, %v1784
  %v1786 = vpop.f32.mrb[0].mxu0
  %1787 = vmatprep.mubr.f32.mxu0 0.0
  %1788 = vmatmul.mubr.f32.gmra.mrb[0].mxu0 %v1686
  %v1789 = vpop.f32.mrb[0].mxu0
  %v1790 = vadd.f32 %v1712, %v1789
  %v1791 = vpop.f32.mrb[0].mxu0
  %1792 = vmatprep.mubr.f32.mxu0 0.0
  %1793 = vmatmul.mubr.f32.gmra.mrb[0].mxu0 %v1687
  %v1794 = vpop.f32.mrb[0].mxu0
  %v1795 = vadd.f32 %v1712, %v1794
  %v1796 = vpop.f32.mrb[0].mxu0
  %1797 = vmatprep.mubr.f32.mxu0 0.0
  %1798 = vmatmul.mubr.f32.gmra.mrb[0].mxu0 %v1688
  %v1799 = vpop.f32.mrb[0].mxu0
  %v1800 = vadd.f32 %v1712, %v1799
  %v1801 = vpop.f32.mrb[0].mxu0
  %1802 = vmatprep.mubr.f32.mxu0 0.0
  %1803 = vmatmul.mubr.f32.gmra.mrb[0].mxu0 %v1689
  %v1804 = vpop.f32.mrb[0].mxu0
  %v1805 = vadd.f32 %v1712, %v1804
  %v1806 = vpop.f32.mrb[0].mxu0
  %1807 = vmatprep.mubr.f32.mxu0 0.0
  %1808 = vmatmul.mubr.f32.gmra.mrb[0].mxu0 %v1690
  %v1809 = vpop.f32.mrb[0].mxu0
  %v1810 = vadd.f32 %v1712, %v1809
  %v1811 = vpop.f32.mrb[0].mxu0
  %1812 = vmatprep.mubr.f32.mxu0 0.0
  %1813 = vmatmul.mubr.f32.gmra.mrb[0].mxu0 %v1691
  %v1814 = vpop.f32.mrb[0].mxu0
  %v1815 = vadd.f32 %v1712, %v1814
  %v1816 = vpop.f32.mrb[0].mxu0
  %1817 = vdwg.mxu0
  %1818 = vst.msk [vmem:[%s3] sm:$0xff] %vm26, %v1780
  %1819 = vst.msk [vmem:[%s3 + $0x8] sm:$0xff] %vm26, %v1785
  %1820 = vst.msk [vmem:[%s3 + $0x10] sm:$0xff] %vm26, %v1790
  %1821 = vst.msk [vmem:[%s3 + $0x18] sm:$0xff] %vm26, %v1795
  %1822 = vst.msk [vmem:[%s3 + $0x20] sm:$0xff] %vm26, %v1800
  %1823 = vst.msk [vmem:[%s3 + $0x28] sm:$0xff] %vm26, %v1805
  %1824 = vst.msk [vmem:[%s3 + $0x30] sm:$0xff] %vm26, %v1810
  %1825 = vst.msk [vmem:[%s3 + $0x38] sm:$0xff] %vm26, %v1815
  // Predicated region
  $region14: #{tpu_custom_call.1} parent=0 // pred_check
    _
  $region15: #{tpu_custom_call.1} parent=0 // pred_check_branch
    %1827 = sbr.rel (0) target = $region17
  $region16: #{tpu_custom_call.1} parent=0 // pred_region
    _
  $region17: #{tpu_custom_call.1} parent=0 // pred_fallthru
    _
  // Predicated region
  $region18: #{tpu_custom_call.1} parent=0 // pred_check
    _
  $region19: #{tpu_custom_call.1} parent=0 // pred_check_branch
    %1829 = sbr.rel (0) target = $region21
  $region20: #{tpu_custom_call.1} parent=0 // pred_region
    _
  $region21: #{tpu_custom_call.1} parent=0 // pred_fallthru
    _

</llo_original>
